<compile_context>
chip_gen: v5e
topology: v5e:2x2
jax: 0.10.0
libtpu: 0.0.40
codegen_flags: <defaults>
</compile_context>

<pallas_src>
import functools

import jax
import jax.numpy as jnp
from jax import lax
from jax.experimental import pallas as pl
from jax.experimental.pallas import tpu as pltpu


def _round_up(x, m):
    return ((x + m - 1) // m) * m


def _lane_pad(x):
    # VMEM blocks are lane-padded to a multiple of 128 in their last dim.
    return _round_up(max(int(x), 1), 128)


_MAX_TILE_N = 32768   # upper bound on rows per sample tile
_MIN_TILE_N = 256


def _vmem_input_budget_bytes():
    """Generation-aware budget for the double-buffered input tiles."""
    try:
        kind = jax.devices()[0].device_kind.lower()
    except Exception:
        kind = ""
    if "v7" in kind:
        # v7x: 64 MiB physical VMEM -> keep the streamed inputs well below.
        return 24 * 1024 * 1024
    # v5e / v6e: 128 MiB physical VMEM.
    return 40 * 1024 * 1024


def _choose_tile_n(n, m, itemsize):
    """Rows per sample tile, sized against the lane-padded VMEM footprint."""
    # Double-buffered (tile, M) theta block + (tile, 1) dt block, lane-padded.
    per_row = 2 * (_lane_pad(m) + _lane_pad(1)) * itemsize
    tile = _vmem_input_budget_bytes() // per_row
    tile = max(_MIN_TILE_N, min(_MAX_TILE_N, tile))
    tile = (tile // 8) * 8
    # No point making the tile larger than the (8-rounded) sample count.
    tile = min(tile, _round_up(max(n, 8), 8))
    return int(tile)


def _gram_kernel(theta_ref, dt_ref, g_ref, r_ref, s_ref, *, n_samples, tile_n):
    """Stream one (tile_n, M) / (tile_n, 1) tile; accumulate G, r, ||dt||^2."""
    k = pl.program_id(1)

    th = theta_ref[...]                       # (tile_n, M), native dtype
    dt = dt_ref[...]                          # (tile_n, 1)

    if n_samples % tile_n != 0:
        # Mask rows past N in the (partial) last tile; OOB rows hold garbage.
        row = lax.broadcasted_iota(jnp.int32, (tile_n, 1), 0) + k * tile_n
        valid = row < n_samples
        th = jnp.where(valid, th, jnp.zeros_like(th))
        dt = jnp.where(valid, dt, jnp.zeros_like(dt))

    # Contract over the sample axis natively on the MXU (no materialized .T),
    # accumulating in f32 even for bf16 inputs.
    g = lax.dot_general(th, th, (((0,), (0,)), ((), ())),
                        preferred_element_type=jnp.float32)         # (M, M)
    r = lax.dot_general(th, dt.astype(th.dtype), (((0,), (0,)), ((), ())),
                        preferred_element_type=jnp.float32)         # (M, 1)
    dt32 = dt.astype(jnp.float32)
    s = jnp.sum(dt32 * dt32, axis=0, keepdims=True)                 # (1, 1)

    @pl.when(k == 0)
    def _init():
        g_ref[...] = g
        r_ref[...] = r
        s_ref[...] = s

    @pl.when(k > 0)
    def _accumulate():
        g_ref[...] += g
        r_ref[...] += r
        s_ref[...] += s


def _gram_stats(theta_b, dt_b):
    """theta_b: (B, N, M), dt_b: (B, N, 1) -> (G (B,M,M), r (B,M,1), s (B,1,1))."""
    b, n, m = theta_b.shape
    th_item = jnp.dtype(theta_b.dtype).itemsize
    dt_item = jnp.dtype(dt_b.dtype).itemsize
    tile_n = _choose_tile_n(n, m, th_item)
    k_steps = pl.cdiv(n, tile_n)

    # Double-buffered, lane-padded input blocks + small headroom for outputs.
    input_bytes = 2 * tile_n * (_lane_pad(m) * th_item + _lane_pad(1) * dt_item)
    vmem_limit = int(input_bytes + 6 * 1024 * 1024)

    kernel = functools.partial(_gram_kernel, n_samples=n, tile_n=tile_n)
    return pl.pallas_call(
        kernel,
        out_shape=(
            jax.ShapeDtypeStruct((b, m, m), jnp.float32),
            jax.ShapeDtypeStruct((b, m, 1), jnp.float32),
            jax.ShapeDtypeStruct((b, 1, 1), jnp.float32),
        ),
        grid_spec=pltpu.PrefetchScalarGridSpec(
            num_scalar_prefetch=0,
            grid=(b, k_steps),
            in_specs=[
                pl.BlockSpec((None, tile_n, m), lambda bi, ki: (bi, ki, 0)),
                pl.BlockSpec((None, tile_n, 1), lambda bi, ki: (bi, ki, 0)),
            ],
            out_specs=[
                pl.BlockSpec((None, m, m), lambda bi, ki: (bi, 0, 0)),
                pl.BlockSpec((None, m, 1), lambda bi, ki: (bi, 0, 0)),
                pl.BlockSpec((None, 1, 1), lambda bi, ki: (bi, 0, 0)),
            ],
        ),
        compiler_params=pltpu.CompilerParams(
            dimension_semantics=("parallel", "arbitrary"),
            vmem_limit_bytes=vmem_limit,
        ),
    )(theta_b, dt_b)


def _fit_from_stats(g, r, s, threshold, ridge_eps, eps):
    """Normalization + thresholded ridge-LSQ from the streamed statistics."""
    m = g.shape[0]
    col_sq = jnp.diagonal(g)                        # per-column ||theta_j||^2
    # NOTE: the eps guard maps all-zero columns to ~0 coefficients instead of
    # the NaN the reference normalization would produce.
    col_norm = jnp.sqrt(jnp.maximum(col_sq, eps))
    y_norm = jnp.sqrt(jnp.maximum(s[0, 0], eps))
    # Gram / rhs of the *normalized* quantities, from the raw streamed stats:
    #   (theta/cn)^T (theta/cn)  = G / (cn_i cn_j)
    #   (theta/cn)^T (dt/||dt||) = r / (cn_i ||dt||)
    g_norm = g / (col_norm[:, None] * col_norm[None, :])
    b_norm = r / (col_norm[:, None] * y_norm)
    coeff = jnp.linalg.solve(
        g_norm + ridge_eps * jnp.eye(m, dtype=g_norm.dtype), b_norm)
    coeff = jnp.where(jnp.abs(coeff) > threshold, coeff, 0.0)   # thresholded "fit"
    return coeff                                                 # (M, 1)


@jax.jit
def _batched_fit(theta_b, dt_b, threshold, ridge_eps, eps):
    """theta_b: (B, N, M), dt_b: (B, N, 1) -> coeffs (B, M, 1), masks (B, M) bool."""
    b, _, m = theta_b.shape
    g_b, r_b, s_b = _gram_stats(theta_b, dt_b)
    coeffs = jax.vmap(
        lambda g, r, s: _fit_from_stats(g, r, s, threshold, ridge_eps, eps)
    )(g_b, r_b, s_b)
    masks = (coeffs != 0.0).reshape(b, m)
    return coeffs, masks


class PallasEstimator:
    """JAX/Pallas equivalent of deepymod's Estimator (thresholded-LSQ concrete fit)."""

    def __init__(self, threshold=0.1, ridge_eps=1e-6, eps=1e-12):
        self.threshold = threshold
        self.ridge_eps = ridge_eps
        self.eps = eps
        self.coeff_vectors = None

    def forward(self, thetas, time_derivs):
        same_shapes = (len({tuple(t.shape) for t in thetas}) == 1
                       and len({tuple(d.shape) for d in time_derivs}) == 1)
        if same_shapes:
            # Keep inputs in their native dtype (no wrapper-side f32 upcast).
            theta_b = jnp.stack(thetas, axis=0)
            dt_b = jnp.stack(
                [d.reshape(d.shape[0], -1)[:, :1] for d in time_derivs], axis=0)
            coeffs, masks = _batched_fit(
                theta_b, dt_b, self.threshold, self.ridge_eps, self.eps)
            self.coeff_vectors = [coeffs[i] for i in range(coeffs.shape[0])]
            return [masks[i] for i in range(masks.shape[0])]

        # Fallback: per-pair calls (B == 1) if outputs have differing shapes.
        coeff_list, mask_list = [], []
        for theta, dt in zip(thetas, time_derivs):
            c, msk = _batched_fit(
                theta[None], dt.reshape(dt.shape[0], -1)[:, :1][None],
                self.threshold, self.ridge_eps, self.eps)
            coeff_list.append(c[0])
            mask_list.append(msk[0])
        self.coeff_vectors = coeff_list
        return mask_list

    __call__ = forward


if __name__ == "__main__":
    key = jax.random.PRNGKey(0)
    N, M = 256, 8          # samples, library terms
    n_outputs = 2

    thetas, time_derivs = [], []
    true_coeff = jnp.array([1.5, 0.0, -2.0, 0.0, 0.0, 0.7, 0.0, 0.0], jnp.float32)
    for i in range(n_outputs):
        key, k1, k2 = jax.random.split(key, 3)
        theta = jax.random.normal(k1, (N, M), dtype=jnp.float32)
        noise = 0.01 * jax.random.normal(k2, (N, 1), dtype=jnp.float32)
        dt = theta @ true_coeff[:, None] + noise
        thetas.append(theta)
        time_derivs.append(dt)

    est = PallasEstimator(threshold=0.1)
    masks = est.forward(thetas, time_derivs)
    masks = [jax.block_until_ready(m) for m in masks]
    coeffs = [jax.block_until_ready(c) for c in est.coeff_vectors]

    # sanity: shapes / dtypes match the torch module's contract
    assert all(m.shape == (M,) and m.dtype == jnp.bool_ for m in masks)
    assert all(c.shape == (M, 1) for c in coeffs)
    # the true sparsity pattern should be recovered for this well-conditioned demo
    expected_mask = (true_coeff != 0.0)
    assert all(bool(jnp.all(m == expected_mask)) for m in masks)

    print("KERNEL_OK")
</pallas_src>

<mosaic_0001>
module attributes {stable_mosaic.version = 11 : i64} {
  func.func @_gram_kernel(%arg0: i32, %arg1: i32, %arg2: memref<1x256x8xf32, #tpu.memory_space<vmem>>, %arg3: memref<1x256x1xf32, #tpu.memory_space<vmem>>, %arg4: memref<1x8x8xf32, #tpu.memory_space<vmem>>, %arg5: memref<1x8x1xf32, #tpu.memory_space<vmem>>, %arg6: memref<1x1x1xf32, #tpu.memory_space<vmem>>) attributes {dimension_semantics = [#tpu.dimension_semantics<parallel>, #tpu.dimension_semantics<arbitrary>], iteration_bounds = array<i64: 2, 1>, scalar_prefetch = 0 : i64, scratch_operands = 0 : i64, tpu.core_type = #tpu.core_type<tc>, window_params = [{transform_indices = @transform_0, window_bounds = array<i64: 1, 256, 8>}, {transform_indices = @transform_1, window_bounds = array<i64: 1, 256, 1>}, {transform_indices = @transform_2, window_bounds = array<i64: 1, 8, 8>}, {transform_indices = @transform_3, window_bounds = array<i64: 1, 8, 1>}, {transform_indices = @transform_4, window_bounds = array<i64: 1, 1, 1>}]} {
    %c0 = arith.constant 0 : index
    %c0_0 = arith.constant 0 : index
    %c0_1 = arith.constant 0 : index
    %0 = vector.load %arg2[%c0, %c0_0, %c0_1] : memref<1x256x8xf32, #tpu.memory_space<vmem>>, vector<1x256x8xf32>
    %1 = vector.shape_cast %0 : vector<1x256x8xf32> to vector<256x8xf32>
    %c0_2 = arith.constant 0 : index
    %c0_3 = arith.constant 0 : index
    %c0_4 = arith.constant 0 : index
    %2 = vector.load %arg3[%c0_2, %c0_3, %c0_4] : memref<1x256x1xf32, #tpu.memory_space<vmem>>, vector<1x256x1xf32>
    %3 = vector.shape_cast %2 : vector<1x256x1xf32> to vector<256x1xf32>
    %cst = arith.constant dense<0.000000e+00> : vector<8x8xf32>
    %4 = tpu.matmul %1, %1, %cst {dimension_numbers = #tpu.dot_dimension_numbers<[0], [0], [1], [1], [0, 1, 1, 1], [], []>} : vector<256x8xf32>, vector<256x8xf32>, vector<8x8xf32> -> vector<8x8xf32>
    %cst_5 = arith.constant dense<0.000000e+00> : vector<8x1xf32>
    %5 = tpu.matmul %1, %3, %cst_5 {dimension_numbers = #tpu.dot_dimension_numbers<[0], [0], [1], [1], [0, 1, 1, 1], [], []>} : vector<256x8xf32>, vector<256x1xf32>, vector<8x1xf32> -> vector<8x1xf32>
    %6 = arith.mulf %3, %3 : vector<256x1xf32>
    %cst_6 = arith.constant dense<0.000000e+00> : vector<1xf32>
    %7 = vector.multi_reduction <add>, %6, %cst_6 [0] : vector<256x1xf32> to vector<1xf32>
    %8 = vector.shape_cast %7 : vector<1xf32> to vector<1x1xf32>
    %c0_i32 = arith.constant 0 : i32
    %9 = arith.cmpi eq, %arg1, %c0_i32 : i32
    %10 = arith.extui %9 : i1 to i32
    %c0_i32_7 = arith.constant 0 : i32
    %11 = arith.cmpi ne, %10, %c0_i32_7 : i32
    scf.if %11 {
      %c0_10 = arith.constant 0 : index
      %c0_11 = arith.constant 0 : index
      %c0_12 = arith.constant 0 : index
      %15 = vector.load %arg4[%c0_10, %c0_11, %c0_12] : memref<1x8x8xf32, #tpu.memory_space<vmem>>, vector<1x8x8xf32>
      %16 = vector.shape_cast %15 : vector<1x8x8xf32> to vector<8x8xf32>
      %17 = vector.shape_cast %4 : vector<8x8xf32> to vector<1x8x8xf32>
      tpu.vector_store %arg4[%c0_10, %c0_11, %c0_12], %17 {strides = array<i32>} : memref<1x8x8xf32, #tpu.memory_space<vmem>>, vector<1x8x8xf32>,
      %c0_13 = arith.constant 0 : index
      %c0_14 = arith.constant 0 : index
      %c0_15 = arith.constant 0 : index
      %18 = vector.load %arg5[%c0_13, %c0_14, %c0_15] : memref<1x8x1xf32, #tpu.memory_space<vmem>>, vector<1x8x1xf32>
      %19 = vector.shape_cast %18 : vector<1x8x1xf32> to vector<8x1xf32>
      %20 = vector.shape_cast %5 : vector<8x1xf32> to vector<1x8x1xf32>
      tpu.vector_store %arg5[%c0_13, %c0_14, %c0_15], %20 {strides = array<i32>} : memref<1x8x1xf32, #tpu.memory_space<vmem>>, vector<1x8x1xf32>,
      %c0_16 = arith.constant 0 : index
      %c0_17 = arith.constant 0 : index
      %c0_18 = arith.constant 0 : index
      %21 = vector.load %arg6[%c0_16, %c0_17, %c0_18] : memref<1x1x1xf32, #tpu.memory_space<vmem>>, vector<1x1x1xf32>
      %22 = vector.shape_cast %21 : vector<1x1x1xf32> to vector<1x1xf32>
      %23 = vector.shape_cast %8 : vector<1x1xf32> to vector<1x1x1xf32>
      tpu.vector_store %arg6[%c0_16, %c0_17, %c0_18], %23 {strides = array<i32>} : memref<1x1x1xf32, #tpu.memory_space<vmem>>, vector<1x1x1xf32>,
    } else {
    }
    %c0_i32_8 = arith.constant 0 : i32
    %12 = arith.cmpi sgt, %arg1, %c0_i32_8 : i32
    %13 = arith.extui %12 : i1 to i32
    %c0_i32_9 = arith.constant 0 : i32
    %14 = arith.cmpi ne, %13, %c0_i32_9 : i32
    scf.if %14 {
      %c0_10 = arith.constant 0 : index
      %c0_11 = arith.constant 0 : index
      %c0_12 = arith.constant 0 : index
      %15 = vector.load %arg4[%c0_10, %c0_11, %c0_12] : memref<1x8x8xf32, #tpu.memory_space<vmem>>, vector<1x8x8xf32>
      %16 = vector.shape_cast %15 : vector<1x8x8xf32> to vector<8x8xf32>
      %17 = arith.addf %16, %4 : vector<8x8xf32>
      %c0_13 = arith.constant 0 : index
      %c0_14 = arith.constant 0 : index
      %c0_15 = arith.constant 0 : index
      %18 = vector.load %arg4[%c0_13, %c0_14, %c0_15] : memref<1x8x8xf32, #tpu.memory_space<vmem>>, vector<1x8x8xf32>
      %19 = vector.shape_cast %18 : vector<1x8x8xf32> to vector<8x8xf32>
      %20 = vector.shape_cast %17 : vector<8x8xf32> to vector<1x8x8xf32>
      tpu.vector_store %arg4[%c0_13, %c0_14, %c0_15], %20 {strides = array<i32>} : memref<1x8x8xf32, #tpu.memory_space<vmem>>, vector<1x8x8xf32>,
      %c0_16 = arith.constant 0 : index
      %c0_17 = arith.constant 0 : index
      %c0_18 = arith.constant 0 : index
      %21 = vector.load %arg5[%c0_16, %c0_17, %c0_18] : memref<1x8x1xf32, #tpu.memory_space<vmem>>, vector<1x8x1xf32>
      %22 = vector.shape_cast %21 : vector<1x8x1xf32> to vector<8x1xf32>
      %23 = arith.addf %22, %5 : vector<8x1xf32>
      %c0_19 = arith.constant 0 : index
      %c0_20 = arith.constant 0 : index
      %c0_21 = arith.constant 0 : index
      %24 = vector.load %arg5[%c0_19, %c0_20, %c0_21] : memref<1x8x1xf32, #tpu.memory_space<vmem>>, vector<1x8x1xf32>
      %25 = vector.shape_cast %24 : vector<1x8x1xf32> to vector<8x1xf32>
      %26 = vector.shape_cast %23 : vector<8x1xf32> to vector<1x8x1xf32>
      tpu.vector_store %arg5[%c0_19, %c0_20, %c0_21], %26 {strides = array<i32>} : memref<1x8x1xf32, #tpu.memory_space<vmem>>, vector<1x8x1xf32>,
      %c0_22 = arith.constant 0 : index
      %c0_23 = arith.constant 0 : index
      %c0_24 = arith.constant 0 : index
      %27 = vector.load %arg6[%c0_22, %c0_23, %c0_24] : memref<1x1x1xf32, #tpu.memory_space<vmem>>, vector<1x1x1xf32>
      %28 = vector.shape_cast %27 : vector<1x1x1xf32> to vector<1x1xf32>
      %29 = arith.addf %28, %8 : vector<1x1xf32>
      %c0_25 = arith.constant 0 : index
      %c0_26 = arith.constant 0 : index
      %c0_27 = arith.constant 0 : index
      %30 = vector.load %arg6[%c0_25, %c0_26, %c0_27] : memref<1x1x1xf32, #tpu.memory_space<vmem>>, vector<1x1x1xf32>
      %31 = vector.shape_cast %30 : vector<1x1x1xf32> to vector<1x1xf32>
      %32 = vector.shape_cast %29 : vector<1x1xf32> to vector<1x1x1xf32>
      tpu.vector_store %arg6[%c0_25, %c0_26, %c0_27], %32 {strides = array<i32>} : memref<1x1x1xf32, #tpu.memory_space<vmem>>, vector<1x1x1xf32>,
    } else {
    }
    return
  }
  func.func @transform_0(%arg0: i32, %arg1: i32) -> (i32, i32, i32) {
    %c0_i32 = arith.constant 0 : i32
    %c0_i32_0 = arith.constant 0 : i32
    return %arg0, %arg1, %c0_i32 : i32, i32, i32
  }
  func.func @transform_1(%arg0: i32, %arg1: i32) -> (i32, i32, i32) {
    %c0_i32 = arith.constant 0 : i32
    %c0_i32_0 = arith.constant 0 : i32
    return %arg0, %arg1, %c0_i32 : i32, i32, i32
  }
  func.func @transform_2(%arg0: i32, %arg1: i32) -> (i32, i32, i32) {
    %c0_i32 = arith.constant 0 : i32
    %c0_i32_0 = arith.constant 0 : i32
    %c0_i32_1 = arith.constant 0 : i32
    return %arg0, %c0_i32, %c0_i32_0 : i32, i32, i32
  }
  func.func @transform_3(%arg0: i32, %arg1: i32) -> (i32, i32, i32) {
    %c0_i32 = arith.constant 0 : i32
    %c0_i32_0 = arith.constant 0 : i32
    %c0_i32_1 = arith.constant 0 : i32
    return %arg0, %c0_i32, %c0_i32_0 : i32, i32, i32
  }
  func.func @transform_4(%arg0: i32, %arg1: i32) -> (i32, i32, i32) {
    %c0_i32 = arith.constant 0 : i32
    %c0_i32_0 = arith.constant 0 : i32
    %c0_i32_1 = arith.constant 0 : i32
    return %arg0, %c0_i32, %c0_i32_0 : i32, i32, i32
  }
}

</mosaic_0001>

<llo_original>
// kernel: custom-call.8
$region0: #{custom-call.8}
  %s0 = inlined_call_operand.vmem [shape: f32[2,8,8], index: 0, kind: input, shape index: {}]
  %s1 = inlined_call_operand.vmem [shape: f32[2,8,8], index: 1, kind: output, shape index: {0}]
  %s2 = inlined_call_operand.hbm [shape: s32[2,8], index: 2, kind: output, shape index: {1}]
  %s3 = inlined_call_operand.vmem [shape: s32[2,8], index: 3, kind: output, shape index: {2}]
  %4 = xla_tuple %s1, %s2, %s3
  $region1: #{custom-call.8} parent=0
    #allocation0 [shape = 'u8[8192]{0}', space=vmem, size = 0x2000, scoped, tag = 'operand span for operand 0']
    #allocation1 [shape = 'u8[8192]{0}', space=vmem, size = 0x2000, scoped, tag = 'operand span for operand 1']
    #allocation2 [shape = 'u8[4096]{0}', space=vmem, size = 0x1000, scoped, tag = 'operand span for operand 2']
    #allocation3 [shape = 'u8[2048]{0}', space=vmem, size = 0x800, scoped, tag = 'packed  for operand 2']
    #allocation4 [shape = 's32[2]{0}', space=sflag, size = 0x8, scoped, tag = 'scoped memory for custom-call.8']
    #allocation5 [shape = 'u8[4096]{0}', space=vmem, size = 0x1000, scoped, tag = 'operand span for operand 3']
    #allocation6 [shape = 'u8[2048]{0}', space=vmem, size = 0x800, scoped, tag = 'packed  for operand 3']
    %5 = vsyncpa [#allocation4], 0
    %s6 = scalar_lea.sflag [#allocation4], 1
    %7 = vsyncpa %s6, 0
    loop: start=0, step=1, limit=4
    $region2: #{custom-call.8} parent=1 // loop_pre_header
      _
    $region3: #{custom-call.8} parent=1 // loop_header
      %s9 = sphi 0, %s13
      %p10 = scmp.ge.s32.totalorder %s9, 4
      %s21 = sphi 0, %s23
      %s24 = sphi 0, %s21
      %s25 = sphi 0, %s24
      %s41 = sphi 0, %s25
      %s49 = sphi 0, %s51
      %s52 = sphi 0, %s49
      %s53 = sphi 0, %s52
      %s69 = sphi 0, %s53
    $region4: #{custom-call.8} parent=1 // loop_header_branch
      %12 = sbr.rel (%p10) target = $region8
    $region5: #{custom-call.8} parent=1 // loop_body
      %s14 = ssub.s32 %s9, 1
      %s15 = ssub.s32 %s9, 2
      %s16 = sadd.s32 %s9, 1
      %s17 = sshrl.u32 %s9, 3
      %s18 = sshrl.u32 %s16, 3
      %s19 = ssub.s32 %s17, %s18
      %p20 = scmp.eq.s32.totalorder %s19, 0
      %s22 = sadd.s32 %s21, 1
      %s23 = scalar_select %p20, %s21, %s22
      %p26 = pneg %p20
      %p27 = scmp.eq.s32.totalorder %s9, 1
      %p28 = por %p26, %p27
      %p29 = scmp.ne.s32.totalorder %s21, %s24
      %p30 = scmp.eq.s32.totalorder %s9, 0
      %p31 = por %p29, %p30
      %p32 = scmp.ne.s32.totalorder %s21, %s24
      %p33 = scmp.eq.s32.totalorder %s14, 1
      %p34 = por %p32, %p33
      %p35 = scmp.ne.s32.totalorder %s24, %s25
      %p36 = scmp.eq.s32.totalorder %s14, 0
      %p37 = por %p35, %p36
      %p38 = scmp.ne.s32.totalorder %s24, %s25
      %p39 = scmp.eq.s32.totalorder %s15, 1
      %p40 = por %p38, %p39
      %p42 = scmp.ne.s32.totalorder %s25, %s41
      %p43 = scmp.eq.s32.totalorder %s15, 0
      %p44 = por %p42, %p43
      %s45 = sshrl.u32 %s9, 3
      %s46 = sshrl.u32 %s16, 3
      %s47 = ssub.s32 %s45, %s46
      %p48 = scmp.eq.s32.totalorder %s47, 0
      %s50 = sadd.s32 %s49, 1
      %s51 = scalar_select %p48, %s49, %s50
      %p54 = pneg %p48
      %p55 = scmp.eq.s32.totalorder %s9, 1
      %p56 = por %p54, %p55
      %p57 = scmp.ne.s32.totalorder %s49, %s52
      %p58 = scmp.eq.s32.totalorder %s9, 0
      %p59 = por %p57, %p58
      %p60 = scmp.ne.s32.totalorder %s49, %s52
      %p61 = scmp.eq.s32.totalorder %s14, 1
      %p62 = por %p60, %p61
      %p63 = scmp.ne.s32.totalorder %s52, %s53
      %p64 = scmp.eq.s32.totalorder %s14, 0
      %p65 = por %p63, %p64
      %p66 = scmp.ne.s32.totalorder %s52, %s53
      %p67 = scmp.eq.s32.totalorder %s15, 1
      %p68 = por %p66, %p67
      %p70 = scmp.ne.s32.totalorder %s53, %s69
      %p71 = scmp.eq.s32.totalorder %s15, 0
      %p72 = por %p70, %p71
      %p73 = scmp.le.s32.totalorder 1, %s9
      %p74 = scmp.lt.s32.totalorder %s9, 3
      %p75 = pnand %p73, %p74
      %p76 = pneg %p75
      // Predicated region
      $region9: #{custom-call.8} parent=5 // pred_check
        _
      $region10: #{custom-call.8} parent=5 // pred_check_branch
        %78 = sbr.rel (%p75) target = $region12
      $region11: #{custom-call.8} parent=5 // pred_region
        %s79 = ssub.s32 %s9, 1
      $region12: #{custom-call.8} parent=5 // pred_fallthru
        _
      %p80 = scmp.lt.s32.totalorder %s9, 2
      // Predicated region
      $region13: #{custom-call.8} parent=5 // pred_check
        %p81 = pneg %p80
      $region14: #{custom-call.8} parent=5 // pred_check_branch
        %83 = sbr.rel (%p81) target = $region16
      $region15: #{custom-call.8} parent=5 // pred_region
        %s84 = sand.u32 %s9, 1
        %s85 = sand.u32 %s9, 1
        %s86 = smul.addr %s85, 8
        %s87 = scalar_lea.vmem [#allocation0], %s86
        %s88 = smul.addr %s9, 8
        %s89 = scalar_lea.vmem %s0, %s88
        // Predicated region
        $region17: #{custom-call.8} parent=15 // pred_check
          _
        $region18: #{custom-call.8} parent=15 // pred_check_branch
          %91 = sbr.rel (0) target = $region20
        $region19: #{custom-call.8} parent=15 // pred_region
          // Predicated region
          $region21: #{custom-call.8} parent=19 // pred_check
            _
          $region22: #{custom-call.8} parent=19 // pred_check_branch
            %93 = sbr.rel (0) target = $region24
          $region23: #{custom-call.8} parent=19 // pred_region
            // Predicated region
            $region36: #{custom-call.8} parent=23 // pred_check
              _
            $region37: #{custom-call.8} parent=23 // pred_check_branch
              %109 = sbr.rel (0) target = $region39
            $region38: #{custom-call.8} parent=23 // pred_region
              loop: start=0, step=1, limit=1
              $region40: #{custom-call.8} parent=38 // loop_pre_header
                _
              $region41: #{custom-call.8} parent=38 // loop_header
                %s111 = sphi 0, %s115
                %p112 = scmp.ge.s32.totalorder %s111, 1
                %s116 = sphi %s89, %s89
                %s117 = sphi %s87, %s87
              $region42: #{custom-call.8} parent=38 // loop_header_branch
                %114 = sbr.rel (%p112) target = $region46
              $region43: #{custom-call.8} parent=38 // loop_body
                %v118 = vld [vmem:[%s116] sm:$0xff]
                %119 = vst [vmem:[%s117] sm:$0xff] %v118
              $region44: #{custom-call.8} parent=38 // loop_footer
                %s115 = sadd.s32 1, %s111
              $region45: #{custom-call.8} parent=38 // loop_footer_branch
                %110 = sbr.rel target = $region41
              $region46: #{custom-call.8} parent=38 // loop_exit
                _
            $region39: #{custom-call.8} parent=23 // pred_fallthru
              _
            // Predicated region
            $region47: #{custom-call.8} parent=23 // pred_check
              _
            $region48: #{custom-call.8} parent=23 // pred_check_branch
              %121 = sbr.rel target = $region50
            $region49: #{custom-call.8} parent=23 // pred_region
              _
            $region50: #{custom-call.8} parent=23 // pred_fallthru
              _
          $region24: #{custom-call.8} parent=19 // pred_fallthru
            _
          // Predicated region
          $region25: #{custom-call.8} parent=19 // pred_check
            _
          $region26: #{custom-call.8} parent=19 // pred_check_branch
            %95 = sbr.rel target = $region28
          $region27: #{custom-call.8} parent=19 // pred_region
            %s97 = ssub.s32 256, 1
            loop: start=0, step=1, limit=1
            $region29: #{custom-call.8} parent=27 // loop_pre_header
              _
            $region30: #{custom-call.8} parent=27 // loop_header
              %s99 = sphi 0, %s103
              %p100 = scmp.ge.s32.totalorder %s99, 1
              %s104 = sphi %s89, %s89
              %s105 = sphi %s87, %s87
            $region31: #{custom-call.8} parent=27 // loop_header_branch
              %102 = sbr.rel (%p100) target = $region35
            $region32: #{custom-call.8} parent=27 // loop_body
              %v106 = vld [vmem:[%s104] sm:%s97]
              %107 = vst [vmem:[%s105] sm:%s97] %v106
            $region33: #{custom-call.8} parent=27 // loop_footer
              %s103 = sadd.s32 1, %s99
            $region34: #{custom-call.8} parent=27 // loop_footer_branch
              %98 = sbr.rel target = $region30
            $region35: #{custom-call.8} parent=27 // loop_exit
              _
          $region28: #{custom-call.8} parent=19 // pred_fallthru
            _
        $region20: #{custom-call.8} parent=15 // pred_fallthru
          _
        %122 = vnop
      $region16: #{custom-call.8} parent=5 // pred_fallthru
        _
      %p123 = scmp.le.s32.totalorder 1, %s9
      %p124 = scmp.lt.s32.totalorder %s9, 3
      %p125 = pnand %p123, %p124
      %p126 = pneg %p125
      // Predicated region
      $region51: #{custom-call.8} parent=5 // pred_check
        _
      $region52: #{custom-call.8} parent=5 // pred_check_branch
        %128 = sbr.rel (%p125) target = $region54
      $region53: #{custom-call.8} parent=5 // pred_region
        #allocation7 [shape = 's32[8,128]{1,0}', space=vmem, size = 0x1000, scoped, tag = 'scratch for permutations']
        %s129 = ssub.s32 %s9, 1
        %s130 = sand.u32 %s14, 1
        %s131 = sand.u32 %s14, 1
        %s132 = smul.addr %s131, 8
        %s133 = scalar_lea.vmem [#allocation0], %s132
        %s134 = sand.u32 %s14, 1
        %s135 = sand.u32 %s14, 1
        %s136 = smul.addr %s135, 8
        %s137 = scalar_lea.vmem [#allocation0], %s136
        %s138 = sand.u32 %s14, 1
        %s139 = sand.u32 %s14, 1
        %s140 = smul.addr %s139, 8
        %s141 = scalar_lea.vmem [#allocation1], %s140
        %p142 = pneg %p37
        %p143 = pneg %p34
        %s144 = sand.u32 %s24, 1
        %s145 = scalar_lea.sflag [#allocation4], %s144
        %s146 = sand.u32 %s24, 1
        %s147 = smul.addr %s146, 2
        %s148 = scalar_lea.vmem [#allocation3], %s147
        %p149 = pneg %p65
        %p150 = pneg %p62
        %s151 = sand.u32 %s52, 1
        %s152 = sand.u32 %s52, 1
        %s153 = smul.addr %s152, 2
        %s154 = scalar_lea.vmem [#allocation6], %s153
        %s155 = sshrl.u32 %s14, 3
        %s156 = sshrl.u32 %s14, 3
        %v157 = vld [vmem:[%s133] sm:$0xff]
        %158 = vst [vmem:[%s141] sm:$0xff] %v157
        %s159 = sand.u32 %s14, 7
        %s160 = scalar_lea.vmem [#allocation2], %s159
        %s161 = sand.u32 %s14, 7
        %s162 = scalar_lea.vmem [#allocation5], %s161
        %163 = vst [vmem:[%s160] sm:$0x1] 0
        %v164 = vlaneseq
        %v165 = vshrl.u32 %v164, 7
        %v166 = vmov %v165
        %168 = vst [vmem:[#allocation7] sm:$0xff] %v166
        loop: start=0, step=1, limit=8
        $region56: #{custom-call.8} parent=53 // loop_pre_header
          _
        $region57: #{custom-call.8} parent=53 // loop_header
          %s170 = sphi 0, %s174
          %p171 = scmp.ge.s32.totalorder %s170, 8
        $region58: #{custom-call.8} parent=53 // loop_header_branch
          %173 = sbr.rel (%p171) target = $region62
        $region59: #{custom-call.8} parent=53 // loop_body
          %v175 = vstv %s170
          %v176 = vlaneseq
          %v177 = vshrl.u32 %v176, 7
          %v178 = vmov %v177
          %v179 = vld [vmem:[%s141] sm:$0xff]
          %v180 = vand.u32 2147483647, %v179
          %v182 = vstv %s170
          %vm183 = vcmp.ge.s32.totalorder %v178, %v182
          %vm184 = vcmp.lt.s32.totalorder %v178, 8
          %vm185 = vmand %vm183, %vm184
          %vm186 = vcmp.lt.f32.partialorder -inf, %v180
          %vm187 = vmand %vm185, %vm186
          %v188 = vsel %vm187, %v178, %v175
          %v189 = vsel %vm187, %v180, -inf
          %v190 = vrot.slane %v189, 1
          %v191 = vrot.slane %v188, 1
          %vm192 = vcmp.ge.f32.partialorder %v190, %v189
          %v193 = vsel %vm192, %v190, %v189
          %v194 = vsel %vm192, %v191, %v188
          %v195 = vrot.slane %v190, 1
          %v196 = vrot.slane %v191, 1
          %vm197 = vcmp.ge.f32.partialorder %v195, %v193
          %v198 = vsel %vm197, %v195, %v193
          %v199 = vsel %vm197, %v196, %v194
          %v200 = vrot.slane %v195, 1
          %v201 = vrot.slane %v196, 1
          %vm202 = vcmp.ge.f32.partialorder %v200, %v198
          %v203 = vsel %vm202, %v200, %v198
          %v204 = vsel %vm202, %v201, %v199
          %v205 = vrot.slane %v200, 1
          %v206 = vrot.slane %v201, 1
          %vm207 = vcmp.ge.f32.partialorder %v205, %v203
          %v208 = vsel %vm207, %v205, %v203
          %v209 = vsel %vm207, %v206, %v204
          %v210 = vrot.slane %v205, 1
          %v211 = vrot.slane %v206, 1
          %vm212 = vcmp.ge.f32.partialorder %v210, %v208
          %v213 = vsel %vm212, %v210, %v208
          %v214 = vsel %vm212, %v211, %v209
          %v215 = vrot.slane %v210, 1
          %v216 = vrot.slane %v211, 1
          %vm217 = vcmp.ge.f32.partialorder %v215, %v213
          %v218 = vsel %vm217, %v215, %v213
          %v219 = vsel %vm217, %v216, %v214
          %v220 = vrot.slane %v215, 1
          %v221 = vrot.slane %v216, 1
          %vm222 = vcmp.ge.f32.partialorder %v220, %v218
          %v223 = vsel %vm222, %v220, %v218
          %v224 = vsel %vm222, %v221, %v219
          %s225 = ssub.s32 128, %s170
          %226 = vrot.lane.b32.xlu0 %v224, %s225
          %v227 = vpop.permute.xlu0 %226
          %s228 = vtos %v227
          %v229 = vstv %s170
          %v230 = vlaneseq
          %v231 = vand.u32 %v230, 127
          %vm232 = vcmp.eq.s32.totalorder %v231, %v229
          %v233 = vstv %s228
          %v234 = vld [vmem:[%s160] ss:$0 sm:$0xff]
          %v235 = vsel %vm232, %v233, %v234
          %236 = vst [vmem:[%s160] sm:$0x1] %v235
          %s237 = scalar_lea.vmem %s141, %s170 [#allocation1]
          %s238 = scalar_lea.vmem %s141, %s228 [#allocation1]
          %v239 = vld [vmem:[%s237] ss:$0 sm:$0xff]
          %v240 = vld [vmem:[%s238] ss:$0 sm:$0xff]
          %241 = vst [vmem:[%s238] sm:$0x1] %v239
          %242 = vst [vmem:[%s237] sm:$0x1] %v240
          %s243 = scalar_lea.vmem [#allocation7], %s170
          %s244 = scalar_lea.vmem [#allocation7], %s228
          %v245 = vld [vmem:[%s243] ss:$0 sm:$0xff]
          %v246 = vld [vmem:[%s244] ss:$0 sm:$0xff]
          %247 = vst [vmem:[%s244] sm:$0x1] %v245
          %248 = vst [vmem:[%s243] sm:$0x1] %v246
          %vm249 = vcmp.ne.f32.partialorder %v240, 0.0
          %vm250 = vmand %vm232, %vm249
          %v251 = vsel %vm250, %v240, 1.0
          %v252 = vlaneseq
          %v253 = vand.u32 %v252, 127
          %v254 = vstv %s170
          %vm255 = vcmp.gt.s32.totalorder %v253, %v254
          %v256 = vsel %vm255, %v240, 0.0
          %v257 = vlaneseq
          %v258 = vshrl.u32 %v257, 7
          %v259 = vmov %v258
          %v260 = vld [vmem:[%s141] sm:$0xff]
          %v262 = vstv %s170
          %vm263 = vcmp.gt.s32.totalorder %v259, %v262
          %v264 = vsel %vm263, %v251, 1.0
          %v265 = vrcp.pop %v264
          %v266 = vmul.f32 %v264, %v265
          %v267 = vsub.f32 1.0, %v266
          %v268 = vmul.f32 %v265, %v267
          %v269 = vadd.f32 %v265, %v268
          %vm270 = vweird.f32 %v264
          %vm271 = vweird.f32 %v265
          %vm272 = vmor %vm270, %vm271
          %v273 = vsel %vm272, %v265, %v269
          %v274 = vand.u32 2147483647, %v264
          %vm275 = vcmp.eq.f32.partialorder %v274, 8.507059e+37
          %v276 = vand.u32 %v264, 2147483648
          %v277 = vor.u32 1.1754944e-38, %v276
          %v278 = vsel %vm275, %v277, %v273
          %v279 = vmul.f32 %v260, %v278
          %vm280 = vmand %vm263, %vm232
          %v281 = vsel %vm280, %v279, 0.0
          %282 = vadd.xlane.f32.xlu0 %v281
          %v283 = vpop.xlane.xlu0 %282
          %v284 = vmul.f32 %v283, %v256
          %v285 = vsub.f32 %v279, %v284
          %286 = vst [vmem:[%s141] sm:$0xff] %v285
        $region60: #{custom-call.8} parent=53 // loop_footer
          %s174 = sadd.s32 1, %s170
        $region61: #{custom-call.8} parent=53 // loop_footer_branch
          %169 = sbr.rel target = $region57
        $region62: #{custom-call.8} parent=53 // loop_exit
          _
        %v287 = vld [vmem:[#allocation7] sm:$0xff]
        %s288 = scalar_lea.vmem [#allocation7], 8
        %s289 = scalar_lea.vmem [#allocation7], 16
        %s290 = scalar_lea.vmem [#allocation7], 24
        %s291 = scalar_lea.vmem [#allocation7], 32
        %s292 = scalar_lea.vmem [#allocation7], 40
        %s293 = scalar_lea.vmem [#allocation7], 48
        %s294 = scalar_lea.vmem [#allocation7], 56
        %s295 = scalar_lea.vmem [#allocation7], 64
        %s296 = scalar_lea.vmem [#allocation7], 72
        %s297 = scalar_lea.vmem [#allocation7], 80
        %s298 = scalar_lea.vmem [#allocation7], 88
        %s299 = scalar_lea.vmem [#allocation7], 96
        %s300 = scalar_lea.vmem [#allocation7], 104
        %s301 = scalar_lea.vmem [#allocation7], 112
        %s302 = scalar_lea.vmem [#allocation7], 120
        %303 = vxpose.xlu0.b32.start [1/16] %v287, 128
        %304 = vxpose.xlu0.b32.cont [2/16] 0, 128
        %305 = vxpose.xlu0.b32.cont [3/16] 0, 128
        %306 = vxpose.xlu0.b32.cont [4/16] 0, 128
        %307 = vxpose.xlu0.b32.cont [5/16] 0, 128
        %308 = vxpose.xlu0.b32.cont [6/16] 0, 128
        %309 = vxpose.xlu0.b32.cont [7/16] 0, 128
        %310 = vxpose.xlu0.b32.cont [8/16] 0, 128
        %311 = vxpose.xlu0.b32.cont [9/16] 0, 128
        %312 = vxpose.xlu0.b32.cont [10/16] 0, 128
        %313 = vxpose.xlu0.b32.cont [11/16] 0, 128
        %314 = vxpose.xlu0.b32.cont [12/16] 0, 128
        %315 = vxpose.xlu0.b32.cont [13/16] 0, 128
        %316 = vxpose.xlu0.b32.cont [14/16] 0, 128
        %317 = vxpose.xlu0.b32.cont [15/16] 0, 128
        %318 = vxpose.xlu0.b32.end [16/16] 0, 128
        %v319 = vpop.trf.xlu0
        %v320 = vpop.trf.xlu0
        %v321 = vpop.trf.xlu0
        %v322 = vpop.trf.xlu0
        %v323 = vpop.trf.xlu0
        %v324 = vpop.trf.xlu0
        %v325 = vpop.trf.xlu0
        %v326 = vpop.trf.xlu0
        %v327 = vpop.trf.xlu0
        %v328 = vpop.trf.xlu0
        %v329 = vpop.trf.xlu0
        %v330 = vpop.trf.xlu0
        %v331 = vpop.trf.xlu0
        %v332 = vpop.trf.xlu0
        %v333 = vpop.trf.xlu0
        %v334 = vpop.trf.xlu0
        %335 = vst [vmem:[%s162] sm:$0x1] %v319
        %s337 = ssub.s32 4, 1
        %v338 = vld [vmem:[#allocation2] sm:%s337]
        %s340 = ssub.s32 4, 1
        %341 = vst [vmem:[%s148] sm:%s340] %v338
        %s343 = ssub.s32 4, 1
        %v344 = vld [vmem:[#allocation5] sm:%s343]
        %s346 = ssub.s32 4, 1
        %347 = vst [vmem:[%s154] sm:%s346] %v344
        %s348 = sand.u32 %s14, 1
        %s349 = sand.u32 %s14, 1
        %s350 = smul.addr %s349, 8
        %s351 = scalar_lea.vmem [#allocation1], %s350
        %s352 = sand.u32 %s24, 1
        %s353 = scalar_lea.sflag [#allocation4], %s352
        %s354 = sand.u32 %s24, 1
        %s355 = smul.addr %s354, 2
        %s356 = scalar_lea.vmem [#allocation3], %s355
        %s357 = sand.u32 %s52, 1
        %s358 = sand.u32 %s52, 1
        %s359 = smul.addr %s358, 2
        %s360 = scalar_lea.vmem [#allocation6], %s359
        %s361 = smul.addr %s14, 8
        %s362 = scalar_lea.vmem %s1, %s361
        // Predicated region
        $region63: #{custom-call.8} parent=53 // pred_check
          _
        $region64: #{custom-call.8} parent=53 // pred_check_branch
          %364 = sbr.rel (0) target = $region66
        $region65: #{custom-call.8} parent=53 // pred_region
          // Predicated region
          $region67: #{custom-call.8} parent=65 // pred_check
            _
          $region68: #{custom-call.8} parent=65 // pred_check_branch
            %366 = sbr.rel (0) target = $region70
          $region69: #{custom-call.8} parent=65 // pred_region
            // Predicated region
            $region82: #{custom-call.8} parent=69 // pred_check
              _
            $region83: #{custom-call.8} parent=69 // pred_check_branch
              %382 = sbr.rel (0) target = $region85
            $region84: #{custom-call.8} parent=69 // pred_region
              loop: start=0, step=1, limit=1
              $region86: #{custom-call.8} parent=84 // loop_pre_header
                _
              $region87: #{custom-call.8} parent=84 // loop_header
                %s384 = sphi 0, %s388
                %p385 = scmp.ge.s32.totalorder %s384, 1
                %s389 = sphi %s351, %s351
                %s390 = sphi %s362, %s362
              $region88: #{custom-call.8} parent=84 // loop_header_branch
                %387 = sbr.rel (%p385) target = $region92
              $region89: #{custom-call.8} parent=84 // loop_body
                %v391 = vld [vmem:[%s389] sm:$0xff]
                %392 = vst [vmem:[%s390] sm:$0xff] %v391
              $region90: #{custom-call.8} parent=84 // loop_footer
                %s388 = sadd.s32 1, %s384
              $region91: #{custom-call.8} parent=84 // loop_footer_branch
                %383 = sbr.rel target = $region87
              $region92: #{custom-call.8} parent=84 // loop_exit
                _
            $region85: #{custom-call.8} parent=69 // pred_fallthru
              _
            // Predicated region
            $region93: #{custom-call.8} parent=69 // pred_check
              _
            $region94: #{custom-call.8} parent=69 // pred_check_branch
              %394 = sbr.rel target = $region96
            $region95: #{custom-call.8} parent=69 // pred_region
              _
            $region96: #{custom-call.8} parent=69 // pred_fallthru
              _
          $region70: #{custom-call.8} parent=65 // pred_fallthru
            _
          // Predicated region
          $region71: #{custom-call.8} parent=65 // pred_check
            _
          $region72: #{custom-call.8} parent=65 // pred_check_branch
            %368 = sbr.rel target = $region74
          $region73: #{custom-call.8} parent=65 // pred_region
            %s370 = ssub.s32 256, 1
            loop: start=0, step=1, limit=1
            $region75: #{custom-call.8} parent=73 // loop_pre_header
              _
            $region76: #{custom-call.8} parent=73 // loop_header
              %s372 = sphi 0, %s376
              %p373 = scmp.ge.s32.totalorder %s372, 1
              %s377 = sphi %s351, %s351
              %s378 = sphi %s362, %s362
            $region77: #{custom-call.8} parent=73 // loop_header_branch
              %375 = sbr.rel (%p373) target = $region81
            $region78: #{custom-call.8} parent=73 // loop_body
              %v379 = vld [vmem:[%s377] sm:%s370]
              %380 = vst [vmem:[%s378] sm:%s370] %v379
            $region79: #{custom-call.8} parent=73 // loop_footer
              %s376 = sadd.s32 1, %s372
            $region80: #{custom-call.8} parent=73 // loop_footer_branch
              %371 = sbr.rel target = $region76
            $region81: #{custom-call.8} parent=73 // loop_exit
              _
          $region74: #{custom-call.8} parent=65 // pred_fallthru
            _
        $region66: #{custom-call.8} parent=53 // pred_fallthru
          _
        %395 = vnop
        // Predicated region
        $region97: #{custom-call.8} parent=53 // pred_check
          %p396 = pneg %p34
        $region98: #{custom-call.8} parent=53 // pred_check_branch
          %398 = sbr.rel (%p396) target = $region100
        $region99: #{custom-call.8} parent=53 // pred_region
          %s399 = sshrl.u32 %s14, 3
          %401 = vsyncadd %s353, 0
          %s402 = smul.addr %s399, 2
          %s403 = scalar_lea.hbm %s2, %s402
          %s405 = sshll.u32 %s356, 4
          %s406 = int_to_ptr.vmem [resolvable:$true] %s405
          %s407 = sshll.u32 %s403, 4
          %s408 = int_to_ptr.hbm [resolvable:$true] %s407
          %410 = dma.vmem_to_hbm [thread:$0]  %s406, 32, %s408, %s353
        $region100: #{custom-call.8} parent=53 // pred_fallthru
          _
        // Predicated region
        $region101: #{custom-call.8} parent=53 // pred_check
          %p411 = pneg %p62
        $region102: #{custom-call.8} parent=53 // pred_check_branch
          %413 = sbr.rel (%p411) target = $region104
        $region103: #{custom-call.8} parent=53 // pred_region
          %s414 = sshrl.u32 %s14, 3
          %s415 = smul.addr %s414, 2
          %s416 = scalar_lea.vmem %s3, %s415
          // Predicated region
          $region105: #{custom-call.8} parent=103 // pred_check
            _
          $region106: #{custom-call.8} parent=103 // pred_check_branch
            %418 = sbr.rel (0) target = $region108
          $region107: #{custom-call.8} parent=103 // pred_region
            // Predicated region
            $region109: #{custom-call.8} parent=107 // pred_check
              _
            $region110: #{custom-call.8} parent=107 // pred_check_branch
              %420 = sbr.rel target = $region112
            $region111: #{custom-call.8} parent=107 // pred_region
              // Predicated region
              $region124: #{custom-call.8} parent=111 // pred_check
                _
              $region125: #{custom-call.8} parent=111 // pred_check_branch
                %436 = sbr.rel (0) target = $region127
              $region126: #{custom-call.8} parent=111 // pred_region
                %s438 = ssub.s32 4, 1
                loop: start=0, step=1, limit=1
                $region128: #{custom-call.8} parent=126 // loop_pre_header
                  _
                $region129: #{custom-call.8} parent=126 // loop_header
                  %s440 = sphi 0, %s444
                  %p441 = scmp.ge.s32.totalorder %s440, 1
                  %s445 = sphi %s360, %s360
                  %s446 = sphi %s416, %s416
                $region130: #{custom-call.8} parent=126 // loop_header_branch
                  %443 = sbr.rel (%p441) target = $region134
                $region131: #{custom-call.8} parent=126 // loop_body
                  %v447 = vld [vmem:[%s445] sm:%s438]
                  %448 = vst [vmem:[%s446] sm:%s438] %v447
                $region132: #{custom-call.8} parent=126 // loop_footer
                  %s444 = sadd.s32 1, %s440
                $region133: #{custom-call.8} parent=126 // loop_footer_branch
                  %439 = sbr.rel target = $region129
                $region134: #{custom-call.8} parent=126 // loop_exit
                  _
              $region127: #{custom-call.8} parent=111 // pred_fallthru
                _
            $region112: #{custom-call.8} parent=107 // pred_fallthru
              _
            // Predicated region
            $region113: #{custom-call.8} parent=107 // pred_check
              _
            $region114: #{custom-call.8} parent=107 // pred_check_branch
              %422 = sbr.rel (0) target = $region116
            $region115: #{custom-call.8} parent=107 // pred_region
              %s424 = ssub.s32 4, 1
              loop: start=0, step=1, limit=1
              $region117: #{custom-call.8} parent=115 // loop_pre_header
                _
              $region118: #{custom-call.8} parent=115 // loop_header
                %s426 = sphi 0, %s430
                %p427 = scmp.ge.s32.totalorder %s426, 1
                %s431 = sphi %s360, %s360
                %s432 = sphi %s416, %s416
              $region119: #{custom-call.8} parent=115 // loop_header_branch
                %429 = sbr.rel (%p427) target = $region123
              $region120: #{custom-call.8} parent=115 // loop_body
                %v433 = vld [vmem:[%s431] sm:%s424]
                %434 = vst [vmem:[%s432] sm:%s424] %v433
              $region121: #{custom-call.8} parent=115 // loop_footer
                %s430 = sadd.s32 1, %s426
              $region122: #{custom-call.8} parent=115 // loop_footer_branch
                %425 = sbr.rel target = $region118
              $region123: #{custom-call.8} parent=115 // loop_exit
                _
            $region116: #{custom-call.8} parent=107 // pred_fallthru
              _
          $region108: #{custom-call.8} parent=103 // pred_fallthru
            _
          %449 = vnop
        $region104: #{custom-call.8} parent=53 // pred_fallthru
          _
      $region54: #{custom-call.8} parent=5 // pred_fallthru
        _
      %p450 = scmp.le.s32.totalorder 2, %s9
      // Predicated region
      $region135: #{custom-call.8} parent=5 // pred_check
        %p451 = pneg %p450
      $region136: #{custom-call.8} parent=5 // pred_check_branch
        %453 = sbr.rel (%p451) target = $region138
      $region137: #{custom-call.8} parent=5 // pred_region
        %s454 = ssub.s32 %s9, 2
        %s455 = sand.u32 %s15, 1
        %s456 = sand.u32 %s15, 1
        %s457 = smul.addr %s456, 8
        %s458 = scalar_lea.vmem [#allocation1], %s457
        // Predicated region
        $region139: #{custom-call.8} parent=137 // pred_check
          %p459 = pneg %p40
        $region140: #{custom-call.8} parent=137 // pred_check_branch
          %461 = sbr.rel (%p459) target = $region142
        $region141: #{custom-call.8} parent=137 // pred_region
          %s462 = sand.u32 %s25, 1
          %s463 = scalar_lea.sflag [#allocation4], %s462
          %s464 = sand.u32 %s25, 1
          %s465 = smul.addr %s464, 2
          %s466 = scalar_lea.vmem [#allocation3], %s465
          %468 = dma.done %s463, 32
        $region142: #{custom-call.8} parent=137 // pred_fallthru
          _
        // Predicated region
        $region143: #{custom-call.8} parent=137 // pred_check
          %p469 = pneg %p68
        $region144: #{custom-call.8} parent=137 // pred_check_branch
          %471 = sbr.rel (%p469) target = $region146
        $region145: #{custom-call.8} parent=137 // pred_region
          %s472 = sand.u32 %s53, 1
          %s473 = sand.u32 %s53, 1
          %s474 = smul.addr %s473, 2
          %s475 = scalar_lea.vmem [#allocation6], %s474
        $region146: #{custom-call.8} parent=137 // pred_fallthru
          _
      $region138: #{custom-call.8} parent=5 // pred_fallthru
        _
    $region6: #{custom-call.8} parent=1 // loop_footer
      %s13 = sadd.s32 1, %s9
    $region7: #{custom-call.8} parent=1 // loop_footer_branch
      %8 = sbr.rel target = $region3
    $region8: #{custom-call.8} parent=1 // loop_exit
      _
    %476 = vsyncpa [#allocation4], 1
    %s477 = scalar_lea.sflag [#allocation4], 1
    %478 = vsyncpa %s477, 1

// kernel: custom-call.10
$region0: #{custom-call.10}
  %s0 = inlined_call_operand.vmem [shape: f32[2,1,8,8], index: 0, kind: input, shape index: {}]
  %s1 = inlined_call_operand.vmem [shape: f32[2,1,8,8], index: 1, kind: output, shape index: {}]
  $region1: #{custom-call.10} parent=0
    #allocation0 [shape = 'u8[8192]{0}', space=vmem, size = 0x2000, scoped, tag = 'operand span for operand 0']
    #allocation1 [shape = 'u8[8192]{0}', space=vmem, size = 0x2000, scoped, tag = 'operand span for operand 1']
    loop: start=0, step=1, limit=4
    $region2: #{custom-call.10} parent=1 // loop_pre_header
      _
    $region3: #{custom-call.10} parent=1 // loop_header
      %s3 = sphi 0, %s7
      %p4 = scmp.ge.s32.totalorder %s3, 4
      %s10 = sphi 0, %s36
      %s11 = sphi 0, %s32
      %s12 = sphi 0, %s28
      %s13 = sphi 0, %s24
      %s14 = sphi 0, %s10
      %s15 = sphi 0, %s11
      %s16 = sphi 0, %s12
      %s17 = sphi 0, %s13
      %s18 = sphi 0, %s14
      %s19 = sphi 0, %s15
      %s20 = sphi 0, %s16
      %s21 = sphi 0, %s17
    $region4: #{custom-call.10} parent=1 // loop_header_branch
      %6 = sbr.rel (%p4) target = $region8
    $region5: #{custom-call.10} parent=1 // loop_body
      %s8 = ssub.s32 %s3, 1
      %s9 = ssub.s32 %s3, 2
      %s22 = sadd.s32 1, %s13
      %p23 = scmp.ge.s32.totalorder %s22, 1
      %s24 = scalar_select %p23, 0, %s22
      %s25 = sadd.s32 1, %s12
      %s26 = scalar_select %p23, %s25, %s12
      %p27 = scmp.ge.s32.totalorder %s26, 1
      %s28 = scalar_select %p27, 0, %s26
      %s29 = sadd.s32 1, %s11
      %s30 = scalar_select %p27, %s29, %s11
      %p31 = scmp.ge.s32.totalorder %s30, 1
      %s32 = scalar_select %p31, 0, %s30
      %s33 = sadd.s32 1, %s10
      %s34 = scalar_select %p31, %s33, %s10
      %p35 = scmp.ge.s32.totalorder %s34, 2
      %s36 = scalar_select %p35, 0, %s34
      %p37 = scmp.le.s32.totalorder 1, %s3
      %p38 = scmp.lt.s32.totalorder %s3, 3
      %p39 = pnand %p37, %p38
      %p40 = pneg %p39
      // Predicated region
      $region9: #{custom-call.10} parent=5 // pred_check
        _
      $region10: #{custom-call.10} parent=5 // pred_check_branch
        %42 = sbr.rel (%p39) target = $region12
      $region11: #{custom-call.10} parent=5 // pred_region
        %s43 = ssub.s32 %s3, 1
      $region12: #{custom-call.10} parent=5 // pred_fallthru
        _
      %p44 = scmp.lt.s32.totalorder %s3, 2
      // Predicated region
      $region13: #{custom-call.10} parent=5 // pred_check
        %p45 = pneg %p44
      $region14: #{custom-call.10} parent=5 // pred_check_branch
        %47 = sbr.rel (%p45) target = $region16
      $region15: #{custom-call.10} parent=5 // pred_region
        %s48 = sand.u32 %s3, 1
        %s49 = sand.u32 %s3, 1
        %s50 = smul.addr %s49, 8
        %s51 = scalar_lea.vmem [#allocation0], %s50
        %s52 = sadd.s32 %s13, %s12
        %s53 = sadd.s32 %s52, %s11
        %s54 = sadd.s32 %s53, %s10
        %s55 = smul.addr %s54, 8
        %s56 = scalar_lea.vmem %s0, %s55
        // Predicated region
        $region17: #{custom-call.10} parent=15 // pred_check
          _
        $region18: #{custom-call.10} parent=15 // pred_check_branch
          %58 = sbr.rel (0) target = $region20
        $region19: #{custom-call.10} parent=15 // pred_region
          // Predicated region
          $region21: #{custom-call.10} parent=19 // pred_check
            _
          $region22: #{custom-call.10} parent=19 // pred_check_branch
            %60 = sbr.rel (0) target = $region24
          $region23: #{custom-call.10} parent=19 // pred_region
            // Predicated region
            $region36: #{custom-call.10} parent=23 // pred_check
              _
            $region37: #{custom-call.10} parent=23 // pred_check_branch
              %76 = sbr.rel (0) target = $region39
            $region38: #{custom-call.10} parent=23 // pred_region
              loop: start=0, step=1, limit=1
              $region40: #{custom-call.10} parent=38 // loop_pre_header
                _
              $region41: #{custom-call.10} parent=38 // loop_header
                %s78 = sphi 0, %s82
                %p79 = scmp.ge.s32.totalorder %s78, 1
                %s83 = sphi %s56, %s56
                %s84 = sphi %s51, %s51
              $region42: #{custom-call.10} parent=38 // loop_header_branch
                %81 = sbr.rel (%p79) target = $region46
              $region43: #{custom-call.10} parent=38 // loop_body
                %v85 = vld [vmem:[%s83] sm:$0xff]
                %86 = vst [vmem:[%s84] sm:$0xff] %v85
              $region44: #{custom-call.10} parent=38 // loop_footer
                %s82 = sadd.s32 1, %s78
              $region45: #{custom-call.10} parent=38 // loop_footer_branch
                %77 = sbr.rel target = $region41
              $region46: #{custom-call.10} parent=38 // loop_exit
                _
            $region39: #{custom-call.10} parent=23 // pred_fallthru
              _
            // Predicated region
            $region47: #{custom-call.10} parent=23 // pred_check
              _
            $region48: #{custom-call.10} parent=23 // pred_check_branch
              %88 = sbr.rel target = $region50
            $region49: #{custom-call.10} parent=23 // pred_region
              _
            $region50: #{custom-call.10} parent=23 // pred_fallthru
              _
          $region24: #{custom-call.10} parent=19 // pred_fallthru
            _
          // Predicated region
          $region25: #{custom-call.10} parent=19 // pred_check
            _
          $region26: #{custom-call.10} parent=19 // pred_check_branch
            %62 = sbr.rel target = $region28
          $region27: #{custom-call.10} parent=19 // pred_region
            %s64 = ssub.s32 256, 1
            loop: start=0, step=1, limit=1
            $region29: #{custom-call.10} parent=27 // loop_pre_header
              _
            $region30: #{custom-call.10} parent=27 // loop_header
              %s66 = sphi 0, %s70
              %p67 = scmp.ge.s32.totalorder %s66, 1
              %s71 = sphi %s56, %s56
              %s72 = sphi %s51, %s51
            $region31: #{custom-call.10} parent=27 // loop_header_branch
              %69 = sbr.rel (%p67) target = $region35
            $region32: #{custom-call.10} parent=27 // loop_body
              %v73 = vld [vmem:[%s71] sm:%s64]
              %74 = vst [vmem:[%s72] sm:%s64] %v73
            $region33: #{custom-call.10} parent=27 // loop_footer
              %s70 = sadd.s32 1, %s66
            $region34: #{custom-call.10} parent=27 // loop_footer_branch
              %65 = sbr.rel target = $region30
            $region35: #{custom-call.10} parent=27 // loop_exit
              _
          $region28: #{custom-call.10} parent=19 // pred_fallthru
            _
        $region20: #{custom-call.10} parent=15 // pred_fallthru
          _
        %89 = vnop
      $region16: #{custom-call.10} parent=5 // pred_fallthru
        _
      %p90 = scmp.le.s32.totalorder 1, %s3
      %p91 = scmp.lt.s32.totalorder %s3, 3
      %p92 = pnand %p90, %p91
      %p93 = pneg %p92
      // Predicated region
      $region51: #{custom-call.10} parent=5 // pred_check
        _
      $region52: #{custom-call.10} parent=5 // pred_check_branch
        %95 = sbr.rel (%p92) target = $region54
      $region53: #{custom-call.10} parent=5 // pred_region
        #allocation2 [shape = 'f32[8,8]{1,0}', space=vmem, size = 0x1000, scoped, tag = 'rescaled input a']
        %s96 = ssub.s32 %s3, 1
        %s97 = sand.u32 %s8, 1
        %s98 = sand.u32 %s8, 1
        %s99 = smul.addr %s98, 8
        %s100 = scalar_lea.vmem [#allocation0], %s99
        %s101 = sand.u32 %s8, 1
        %s102 = sand.u32 %s8, 1
        %s103 = smul.addr %s102, 8
        %s104 = scalar_lea.vmem [#allocation0], %s103
        %s105 = sand.u32 %s8, 1
        %s106 = sand.u32 %s8, 1
        %s107 = smul.addr %s106, 8
        %s108 = scalar_lea.vmem [#allocation1], %s107
        %v109 = vlaneseq
        %v110 = vand.u32 %v109, 127
        %vm111 = vcmp.lt.s32.totalorder %v110, 8
        %v112 = vlaneseq
        %v113 = vshrl.u32 %v112, 7
        %vm115 = vcmp.eq.s32.totalorder %v113, %v110
        %v116 = vld [vmem:[%s100] sm:$0xff]
        %v117 = vsel %vm115, %v116, 0.0
        %118 = vadd.xlane.f32.xlu0 %v117
        %v119 = vpop.xlane.xlu0 %118
        %vm120 = vcmp.ge.s32.totalorder %v113, %v110
        %vm121 = vmand %vm120, %vm111
        %v122 = vsel %vm121, %v116, 0.0
        %v123 = vrcp.pop %v119
        %v124 = vmul.f32 %v119, %v123
        %v125 = vsub.f32 1.0, %v124
        %v126 = vmul.f32 %v123, %v125
        %v127 = vadd.f32 %v123, %v126
        %vm128 = vweird.f32 %v119
        %vm129 = vweird.f32 %v123
        %vm130 = vmor %vm128, %vm129
        %v131 = vsel %vm130, %v123, %v127
        %v132 = vand.u32 2147483647, %v119
        %vm133 = vcmp.eq.f32.partialorder %v132, 8.507059e+37
        %v134 = vand.u32 %v119, 2147483648
        %v135 = vor.u32 1.1754944e-38, %v134
        %v136 = vsel %vm133, %v135, %v131
        %v137 = vmul.f32 %v122, %v136
        %138 = vst [vmem:[#allocation2] sm:$0xff] %v137
        %v139 = vlaneseq
        %v140 = vand.u32 %v139, 127
        %v141 = vlaneseq
        %v142 = vshrl.u32 %v141, 7
        %vm144 = vcmp.eq.s32.totalorder %v140, %v142
        %v145 = vlaneseq
        %v146 = vand.u32 %v145, 127
        %vm147 = vcmp.eq.s32.totalorder %v146, 0
        %v148 = vsel %vm147, 1.0, -1.0
        %v149 = vsel %vm144, %v148, 0.0
        %s150 = scalar_lea.vmem [#allocation2], 1
        %v151 = vld [vmem:[%s150] ss:$0 sm:$0xff]
        %v152 = vxor.u32 %v151, 2147483648
        %v153 = vlaneseq
        %v154 = vand.u32 %v153, 127
        %vm155 = vcmp.eq.s32.totalorder %v154, 1
        %v156 = vmul.f32 %v152, %v149
        %157 = vadd.xlane.f32.xlu0 %v156
        %v158 = vpop.xlane.xlu0 %157
        %v159 = vsel %vm155, %v158, %v149
        %s160 = scalar_lea.vmem [#allocation2], 2
        %v161 = vld [vmem:[%s160] ss:$0 sm:$0xff]
        %v162 = vxor.u32 %v161, 2147483648
        %v163 = vlaneseq
        %v164 = vand.u32 %v163, 127
        %vm165 = vcmp.eq.s32.totalorder %v164, 2
        %v166 = vmul.f32 %v162, %v159
        %167 = vadd.xlane.f32.xlu0 %v166
        %v168 = vpop.xlane.xlu0 %167
        %v169 = vsel %vm165, %v168, %v159
        %s170 = scalar_lea.vmem [#allocation2], 3
        %v171 = vld [vmem:[%s170] ss:$0 sm:$0xff]
        %v172 = vxor.u32 %v171, 2147483648
        %v173 = vlaneseq
        %v174 = vand.u32 %v173, 127
        %vm175 = vcmp.eq.s32.totalorder %v174, 3
        %v176 = vmul.f32 %v172, %v169
        %177 = vadd.xlane.f32.xlu0 %v176
        %v178 = vpop.xlane.xlu0 %177
        %v179 = vsel %vm175, %v178, %v169
        %s180 = scalar_lea.vmem [#allocation2], 4
        %v181 = vld [vmem:[%s180] ss:$0 sm:$0xff]
        %v182 = vxor.u32 %v181, 2147483648
        %v183 = vlaneseq
        %v184 = vand.u32 %v183, 127
        %vm185 = vcmp.eq.s32.totalorder %v184, 4
        %v186 = vmul.f32 %v182, %v179
        %187 = vadd.xlane.f32.xlu0 %v186
        %v188 = vpop.xlane.xlu0 %187
        %v189 = vsel %vm185, %v188, %v179
        %s190 = scalar_lea.vmem [#allocation2], 5
        %v191 = vld [vmem:[%s190] ss:$0 sm:$0xff]
        %v192 = vxor.u32 %v191, 2147483648
        %v193 = vlaneseq
        %v194 = vand.u32 %v193, 127
        %vm195 = vcmp.eq.s32.totalorder %v194, 5
        %v196 = vmul.f32 %v192, %v189
        %197 = vadd.xlane.f32.xlu0 %v196
        %v198 = vpop.xlane.xlu0 %197
        %v199 = vsel %vm195, %v198, %v189
        %s200 = scalar_lea.vmem [#allocation2], 6
        %v201 = vld [vmem:[%s200] ss:$0 sm:$0xff]
        %v202 = vxor.u32 %v201, 2147483648
        %v203 = vlaneseq
        %v204 = vand.u32 %v203, 127
        %vm205 = vcmp.eq.s32.totalorder %v204, 6
        %v206 = vmul.f32 %v202, %v199
        %207 = vadd.xlane.f32.xlu0 %v206
        %v208 = vpop.xlane.xlu0 %207
        %v209 = vsel %vm205, %v208, %v199
        %s210 = scalar_lea.vmem [#allocation2], 7
        %v211 = vld [vmem:[%s210] ss:$0 sm:$0xff]
        %v212 = vxor.u32 %v211, 2147483648
        %v213 = vlaneseq
        %v214 = vand.u32 %v213, 127
        %vm215 = vcmp.eq.s32.totalorder %v214, 7
        %v216 = vmul.f32 %v212, %v209
        %217 = vadd.xlane.f32.xlu0 %v216
        %v218 = vpop.xlane.xlu0 %217
        %v219 = vsel %vm215, %v218, %v209
        %v220 = vrcp.pop %v119
        %v221 = vmul.f32 %v119, %v220
        %v222 = vsub.f32 1.0, %v221
        %v223 = vmul.f32 %v220, %v222
        %v224 = vadd.f32 %v220, %v223
        %vm225 = vweird.f32 %v119
        %vm226 = vweird.f32 %v220
        %vm227 = vmor %vm225, %vm226
        %v228 = vsel %vm227, %v220, %v224
        %v229 = vand.u32 2147483647, %v119
        %vm230 = vcmp.eq.f32.partialorder %v229, 8.507059e+37
        %v231 = vand.u32 %v119, 2147483648
        %v232 = vor.u32 1.1754944e-38, %v231
        %v233 = vsel %vm230, %v232, %v228
        %v234 = vmul.f32 %v219, %v233
        %vm235 = vweird.f32 %v119
        %v236 = vsel %vm235, %v219, %v234
        %237 = vst [vmem:[%s108] sm:$0xff] %v236
        %s238 = sand.u32 %s8, 1
        %s239 = sand.u32 %s8, 1
        %s240 = smul.addr %s239, 8
        %s241 = scalar_lea.vmem [#allocation1], %s240
        %s242 = sadd.s32 %s17, %s16
        %s243 = sadd.s32 %s242, %s15
        %s244 = sadd.s32 %s243, %s14
        %s245 = smul.addr %s244, 8
        %s246 = scalar_lea.vmem %s1, %s245
        // Predicated region
        $region55: #{custom-call.10} parent=53 // pred_check
          _
        $region56: #{custom-call.10} parent=53 // pred_check_branch
          %248 = sbr.rel (0) target = $region58
        $region57: #{custom-call.10} parent=53 // pred_region
          // Predicated region
          $region59: #{custom-call.10} parent=57 // pred_check
            _
          $region60: #{custom-call.10} parent=57 // pred_check_branch
            %250 = sbr.rel (0) target = $region62
          $region61: #{custom-call.10} parent=57 // pred_region
            // Predicated region
            $region74: #{custom-call.10} parent=61 // pred_check
              _
            $region75: #{custom-call.10} parent=61 // pred_check_branch
              %266 = sbr.rel (0) target = $region77
            $region76: #{custom-call.10} parent=61 // pred_region
              loop: start=0, step=1, limit=1
              $region78: #{custom-call.10} parent=76 // loop_pre_header
                _
              $region79: #{custom-call.10} parent=76 // loop_header
                %s268 = sphi 0, %s272
                %p269 = scmp.ge.s32.totalorder %s268, 1
                %s273 = sphi %s241, %s241
                %s274 = sphi %s246, %s246
              $region80: #{custom-call.10} parent=76 // loop_header_branch
                %271 = sbr.rel (%p269) target = $region84
              $region81: #{custom-call.10} parent=76 // loop_body
                %v275 = vld [vmem:[%s273] sm:$0xff]
                %276 = vst [vmem:[%s274] sm:$0xff] %v275
              $region82: #{custom-call.10} parent=76 // loop_footer
                %s272 = sadd.s32 1, %s268
              $region83: #{custom-call.10} parent=76 // loop_footer_branch
                %267 = sbr.rel target = $region79
              $region84: #{custom-call.10} parent=76 // loop_exit
                _
            $region77: #{custom-call.10} parent=61 // pred_fallthru
              _
            // Predicated region
            $region85: #{custom-call.10} parent=61 // pred_check
              _
            $region86: #{custom-call.10} parent=61 // pred_check_branch
              %278 = sbr.rel target = $region88
            $region87: #{custom-call.10} parent=61 // pred_region
              _
            $region88: #{custom-call.10} parent=61 // pred_fallthru
              _
          $region62: #{custom-call.10} parent=57 // pred_fallthru
            _
          // Predicated region
          $region63: #{custom-call.10} parent=57 // pred_check
            _
          $region64: #{custom-call.10} parent=57 // pred_check_branch
            %252 = sbr.rel target = $region66
          $region65: #{custom-call.10} parent=57 // pred_region
            %s254 = ssub.s32 256, 1
            loop: start=0, step=1, limit=1
            $region67: #{custom-call.10} parent=65 // loop_pre_header
              _
            $region68: #{custom-call.10} parent=65 // loop_header
              %s256 = sphi 0, %s260
              %p257 = scmp.ge.s32.totalorder %s256, 1
              %s261 = sphi %s241, %s241
              %s262 = sphi %s246, %s246
            $region69: #{custom-call.10} parent=65 // loop_header_branch
              %259 = sbr.rel (%p257) target = $region73
            $region70: #{custom-call.10} parent=65 // loop_body
              %v263 = vld [vmem:[%s261] sm:%s254]
              %264 = vst [vmem:[%s262] sm:%s254] %v263
            $region71: #{custom-call.10} parent=65 // loop_footer
              %s260 = sadd.s32 1, %s256
            $region72: #{custom-call.10} parent=65 // loop_footer_branch
              %255 = sbr.rel target = $region68
            $region73: #{custom-call.10} parent=65 // loop_exit
              _
          $region66: #{custom-call.10} parent=57 // pred_fallthru
            _
        $region58: #{custom-call.10} parent=53 // pred_fallthru
          _
        %279 = vnop
      $region54: #{custom-call.10} parent=5 // pred_fallthru
        _
      %p280 = scmp.le.s32.totalorder 2, %s3
      // Predicated region
      $region89: #{custom-call.10} parent=5 // pred_check
        %p281 = pneg %p280
      $region90: #{custom-call.10} parent=5 // pred_check_branch
        %283 = sbr.rel (%p281) target = $region92
      $region91: #{custom-call.10} parent=5 // pred_region
        %s284 = ssub.s32 %s3, 2
        %s285 = sand.u32 %s9, 1
        %s286 = sand.u32 %s9, 1
        %s287 = smul.addr %s286, 8
        %s288 = scalar_lea.vmem [#allocation1], %s287
      $region92: #{custom-call.10} parent=5 // pred_fallthru
        _
    $region6: #{custom-call.10} parent=1 // loop_footer
      %s7 = sadd.s32 1, %s3
    $region7: #{custom-call.10} parent=1 // loop_footer_branch
      %2 = sbr.rel target = $region3
    $region8: #{custom-call.10} parent=1 // loop_exit
      _

// kernel: custom-call.9
$region0: #{custom-call.9}
  %s0 = inlined_call_operand.vmem [shape: f32[2,1,8,8], index: 0, kind: input, shape index: {}]
  %s1 = inlined_call_operand.vmem [shape: f32[2,1,8,8], index: 1, kind: output, shape index: {}]
  $region1: #{custom-call.9} parent=0
    #allocation0 [shape = 'u8[8192]{0}', space=vmem, size = 0x2000, scoped, tag = 'operand span for operand 0']
    #allocation1 [shape = 'u8[8192]{0}', space=vmem, size = 0x2000, scoped, tag = 'operand span for operand 1']
    loop: start=0, step=1, limit=4
    $region2: #{custom-call.9} parent=1 // loop_pre_header
      _
    $region3: #{custom-call.9} parent=1 // loop_header
      %s3 = sphi 0, %s7
      %p4 = scmp.ge.s32.totalorder %s3, 4
      %s10 = sphi 0, %s36
      %s11 = sphi 0, %s32
      %s12 = sphi 0, %s28
      %s13 = sphi 0, %s24
      %s14 = sphi 0, %s10
      %s15 = sphi 0, %s11
      %s16 = sphi 0, %s12
      %s17 = sphi 0, %s13
      %s18 = sphi 0, %s14
      %s19 = sphi 0, %s15
      %s20 = sphi 0, %s16
      %s21 = sphi 0, %s17
    $region4: #{custom-call.9} parent=1 // loop_header_branch
      %6 = sbr.rel (%p4) target = $region8
    $region5: #{custom-call.9} parent=1 // loop_body
      %s8 = ssub.s32 %s3, 1
      %s9 = ssub.s32 %s3, 2
      %s22 = sadd.s32 1, %s13
      %p23 = scmp.ge.s32.totalorder %s22, 1
      %s24 = scalar_select %p23, 0, %s22
      %s25 = sadd.s32 1, %s12
      %s26 = scalar_select %p23, %s25, %s12
      %p27 = scmp.ge.s32.totalorder %s26, 1
      %s28 = scalar_select %p27, 0, %s26
      %s29 = sadd.s32 1, %s11
      %s30 = scalar_select %p27, %s29, %s11
      %p31 = scmp.ge.s32.totalorder %s30, 1
      %s32 = scalar_select %p31, 0, %s30
      %s33 = sadd.s32 1, %s10
      %s34 = scalar_select %p31, %s33, %s10
      %p35 = scmp.ge.s32.totalorder %s34, 2
      %s36 = scalar_select %p35, 0, %s34
      %p37 = scmp.le.s32.totalorder 1, %s3
      %p38 = scmp.lt.s32.totalorder %s3, 3
      %p39 = pnand %p37, %p38
      %p40 = pneg %p39
      // Predicated region
      $region9: #{custom-call.9} parent=5 // pred_check
        _
      $region10: #{custom-call.9} parent=5 // pred_check_branch
        %42 = sbr.rel (%p39) target = $region12
      $region11: #{custom-call.9} parent=5 // pred_region
        %s43 = ssub.s32 %s3, 1
      $region12: #{custom-call.9} parent=5 // pred_fallthru
        _
      %p44 = scmp.lt.s32.totalorder %s3, 2
      // Predicated region
      $region13: #{custom-call.9} parent=5 // pred_check
        %p45 = pneg %p44
      $region14: #{custom-call.9} parent=5 // pred_check_branch
        %47 = sbr.rel (%p45) target = $region16
      $region15: #{custom-call.9} parent=5 // pred_region
        %s48 = sand.u32 %s3, 1
        %s49 = sand.u32 %s3, 1
        %s50 = smul.addr %s49, 8
        %s51 = scalar_lea.vmem [#allocation0], %s50
        %s52 = sadd.s32 %s13, %s12
        %s53 = sadd.s32 %s52, %s11
        %s54 = sadd.s32 %s53, %s10
        %s55 = smul.addr %s54, 8
        %s56 = scalar_lea.vmem %s0, %s55
        // Predicated region
        $region17: #{custom-call.9} parent=15 // pred_check
          _
        $region18: #{custom-call.9} parent=15 // pred_check_branch
          %58 = sbr.rel (0) target = $region20
        $region19: #{custom-call.9} parent=15 // pred_region
          // Predicated region
          $region21: #{custom-call.9} parent=19 // pred_check
            _
          $region22: #{custom-call.9} parent=19 // pred_check_branch
            %60 = sbr.rel (0) target = $region24
          $region23: #{custom-call.9} parent=19 // pred_region
            // Predicated region
            $region36: #{custom-call.9} parent=23 // pred_check
              _
            $region37: #{custom-call.9} parent=23 // pred_check_branch
              %76 = sbr.rel (0) target = $region39
            $region38: #{custom-call.9} parent=23 // pred_region
              loop: start=0, step=1, limit=1
              $region40: #{custom-call.9} parent=38 // loop_pre_header
                _
              $region41: #{custom-call.9} parent=38 // loop_header
                %s78 = sphi 0, %s82
                %p79 = scmp.ge.s32.totalorder %s78, 1
                %s83 = sphi %s56, %s56
                %s84 = sphi %s51, %s51
              $region42: #{custom-call.9} parent=38 // loop_header_branch
                %81 = sbr.rel (%p79) target = $region46
              $region43: #{custom-call.9} parent=38 // loop_body
                %v85 = vld [vmem:[%s83] sm:$0xff]
                %86 = vst [vmem:[%s84] sm:$0xff] %v85
              $region44: #{custom-call.9} parent=38 // loop_footer
                %s82 = sadd.s32 1, %s78
              $region45: #{custom-call.9} parent=38 // loop_footer_branch
                %77 = sbr.rel target = $region41
              $region46: #{custom-call.9} parent=38 // loop_exit
                _
            $region39: #{custom-call.9} parent=23 // pred_fallthru
              _
            // Predicated region
            $region47: #{custom-call.9} parent=23 // pred_check
              _
            $region48: #{custom-call.9} parent=23 // pred_check_branch
              %88 = sbr.rel target = $region50
            $region49: #{custom-call.9} parent=23 // pred_region
              _
            $region50: #{custom-call.9} parent=23 // pred_fallthru
              _
          $region24: #{custom-call.9} parent=19 // pred_fallthru
            _
          // Predicated region
          $region25: #{custom-call.9} parent=19 // pred_check
            _
          $region26: #{custom-call.9} parent=19 // pred_check_branch
            %62 = sbr.rel target = $region28
          $region27: #{custom-call.9} parent=19 // pred_region
            %s64 = ssub.s32 256, 1
            loop: start=0, step=1, limit=1
            $region29: #{custom-call.9} parent=27 // loop_pre_header
              _
            $region30: #{custom-call.9} parent=27 // loop_header
              %s66 = sphi 0, %s70
              %p67 = scmp.ge.s32.totalorder %s66, 1
              %s71 = sphi %s56, %s56
              %s72 = sphi %s51, %s51
            $region31: #{custom-call.9} parent=27 // loop_header_branch
              %69 = sbr.rel (%p67) target = $region35
            $region32: #{custom-call.9} parent=27 // loop_body
              %v73 = vld [vmem:[%s71] sm:%s64]
              %74 = vst [vmem:[%s72] sm:%s64] %v73
            $region33: #{custom-call.9} parent=27 // loop_footer
              %s70 = sadd.s32 1, %s66
            $region34: #{custom-call.9} parent=27 // loop_footer_branch
              %65 = sbr.rel target = $region30
            $region35: #{custom-call.9} parent=27 // loop_exit
              _
          $region28: #{custom-call.9} parent=19 // pred_fallthru
            _
        $region20: #{custom-call.9} parent=15 // pred_fallthru
          _
        %89 = vnop
      $region16: #{custom-call.9} parent=5 // pred_fallthru
        _
      %p90 = scmp.le.s32.totalorder 1, %s3
      %p91 = scmp.lt.s32.totalorder %s3, 3
      %p92 = pnand %p90, %p91
      %p93 = pneg %p92
      // Predicated region
      $region51: #{custom-call.9} parent=5 // pred_check
        _
      $region52: #{custom-call.9} parent=5 // pred_check_branch
        %95 = sbr.rel (%p92) target = $region54
      $region53: #{custom-call.9} parent=5 // pred_region
        #allocation2 [shape = 'f32[8,8]{1,0}', space=vmem, size = 0x1000, scoped, tag = 'rescaled input a']
        %s96 = ssub.s32 %s3, 1
        %s97 = sand.u32 %s8, 1
        %s98 = sand.u32 %s8, 1
        %s99 = smul.addr %s98, 8
        %s100 = scalar_lea.vmem [#allocation0], %s99
        %s101 = sand.u32 %s8, 1
        %s102 = sand.u32 %s8, 1
        %s103 = smul.addr %s102, 8
        %s104 = scalar_lea.vmem [#allocation0], %s103
        %s105 = sand.u32 %s8, 1
        %s106 = sand.u32 %s8, 1
        %s107 = smul.addr %s106, 8
        %s108 = scalar_lea.vmem [#allocation1], %s107
        %v109 = vlaneseq
        %v110 = vand.u32 %v109, 127
        %vm111 = vcmp.lt.s32.totalorder %v110, 8
        %v112 = vlaneseq
        %v113 = vshrl.u32 %v112, 7
        %vm115 = vcmp.eq.s32.totalorder %v113, %v110
        %v116 = vld [vmem:[%s100] sm:$0xff]
        %v117 = vsel %vm115, %v116, 0.0
        %118 = vadd.xlane.f32.xlu0 %v117
        %v119 = vpop.xlane.xlu0 %118
        %vm120 = vcmp.le.s32.totalorder %v113, %v110
        %vm121 = vmand %vm120, %vm111
        %v122 = vsel %vm121, %v116, 0.0
        %v123 = vrcp.pop %v119
        %v124 = vmul.f32 %v119, %v123
        %v125 = vsub.f32 1.0, %v124
        %v126 = vmul.f32 %v123, %v125
        %v127 = vadd.f32 %v123, %v126
        %vm128 = vweird.f32 %v119
        %vm129 = vweird.f32 %v123
        %vm130 = vmor %vm128, %vm129
        %v131 = vsel %vm130, %v123, %v127
        %v132 = vand.u32 2147483647, %v119
        %vm133 = vcmp.eq.f32.partialorder %v132, 8.507059e+37
        %v134 = vand.u32 %v119, 2147483648
        %v135 = vor.u32 1.1754944e-38, %v134
        %v136 = vsel %vm133, %v135, %v131
        %v137 = vmul.f32 %v122, %v136
        %138 = vst [vmem:[#allocation2] sm:$0xff] %v137
        %v139 = vlaneseq
        %v140 = vand.u32 %v139, 127
        %v141 = vlaneseq
        %v142 = vshrl.u32 %v141, 7
        %vm144 = vcmp.eq.s32.totalorder %v140, %v142
        %v145 = vlaneseq
        %v146 = vand.u32 %v145, 127
        %vm147 = vcmp.eq.s32.totalorder %v146, 7
        %v148 = vsel %vm147, 1.0, -1.0
        %v149 = vsel %vm144, %v148, 0.0
        %s150 = scalar_lea.vmem [#allocation2], 6
        %v151 = vld [vmem:[%s150] ss:$0 sm:$0xff]
        %v152 = vxor.u32 %v151, 2147483648
        %v153 = vlaneseq
        %v154 = vand.u32 %v153, 127
        %vm155 = vcmp.eq.s32.totalorder %v154, 6
        %v156 = vmul.f32 %v152, %v149
        %157 = vadd.xlane.f32.xlu0 %v156
        %v158 = vpop.xlane.xlu0 %157
        %v159 = vsel %vm155, %v158, %v149
        %s160 = scalar_lea.vmem [#allocation2], 5
        %v161 = vld [vmem:[%s160] ss:$0 sm:$0xff]
        %v162 = vxor.u32 %v161, 2147483648
        %v163 = vlaneseq
        %v164 = vand.u32 %v163, 127
        %vm165 = vcmp.eq.s32.totalorder %v164, 5
        %v166 = vmul.f32 %v162, %v159
        %167 = vadd.xlane.f32.xlu0 %v166
        %v168 = vpop.xlane.xlu0 %167
        %v169 = vsel %vm165, %v168, %v159
        %s170 = scalar_lea.vmem [#allocation2], 4
        %v171 = vld [vmem:[%s170] ss:$0 sm:$0xff]
        %v172 = vxor.u32 %v171, 2147483648
        %v173 = vlaneseq
        %v174 = vand.u32 %v173, 127
        %vm175 = vcmp.eq.s32.totalorder %v174, 4
        %v176 = vmul.f32 %v172, %v169
        %177 = vadd.xlane.f32.xlu0 %v176
        %v178 = vpop.xlane.xlu0 %177
        %v179 = vsel %vm175, %v178, %v169
        %s180 = scalar_lea.vmem [#allocation2], 3
        %v181 = vld [vmem:[%s180] ss:$0 sm:$0xff]
        %v182 = vxor.u32 %v181, 2147483648
        %v183 = vlaneseq
        %v184 = vand.u32 %v183, 127
        %vm185 = vcmp.eq.s32.totalorder %v184, 3
        %v186 = vmul.f32 %v182, %v179
        %187 = vadd.xlane.f32.xlu0 %v186
        %v188 = vpop.xlane.xlu0 %187
        %v189 = vsel %vm185, %v188, %v179
        %s190 = scalar_lea.vmem [#allocation2], 2
        %v191 = vld [vmem:[%s190] ss:$0 sm:$0xff]
        %v192 = vxor.u32 %v191, 2147483648
        %v193 = vlaneseq
        %v194 = vand.u32 %v193, 127
        %vm195 = vcmp.eq.s32.totalorder %v194, 2
        %v196 = vmul.f32 %v192, %v189
        %197 = vadd.xlane.f32.xlu0 %v196
        %v198 = vpop.xlane.xlu0 %197
        %v199 = vsel %vm195, %v198, %v189
        %s200 = scalar_lea.vmem [#allocation2], 1
        %v201 = vld [vmem:[%s200] ss:$0 sm:$0xff]
        %v202 = vxor.u32 %v201, 2147483648
        %v203 = vlaneseq
        %v204 = vand.u32 %v203, 127
        %vm205 = vcmp.eq.s32.totalorder %v204, 1
        %v206 = vmul.f32 %v202, %v199
        %207 = vadd.xlane.f32.xlu0 %v206
        %v208 = vpop.xlane.xlu0 %207
        %v209 = vsel %vm205, %v208, %v199
        %v210 = vld [vmem:[#allocation2] ss:$0 sm:$0xff]
        %v211 = vxor.u32 %v210, 2147483648
        %v212 = vlaneseq
        %v213 = vand.u32 %v212, 127
        %vm214 = vcmp.eq.s32.totalorder %v213, 0
        %v215 = vmul.f32 %v211, %v209
        %216 = vadd.xlane.f32.xlu0 %v215
        %v217 = vpop.xlane.xlu0 %216
        %v218 = vsel %vm214, %v217, %v209
        %v219 = vrcp.pop %v119
        %v220 = vmul.f32 %v119, %v219
        %v221 = vsub.f32 1.0, %v220
        %v222 = vmul.f32 %v219, %v221
        %v223 = vadd.f32 %v219, %v222
        %vm224 = vweird.f32 %v119
        %vm225 = vweird.f32 %v219
        %vm226 = vmor %vm224, %vm225
        %v227 = vsel %vm226, %v219, %v223
        %v228 = vand.u32 2147483647, %v119
        %vm229 = vcmp.eq.f32.partialorder %v228, 8.507059e+37
        %v230 = vand.u32 %v119, 2147483648
        %v231 = vor.u32 1.1754944e-38, %v230
        %v232 = vsel %vm229, %v231, %v227
        %v233 = vmul.f32 %v218, %v232
        %vm234 = vweird.f32 %v119
        %v235 = vsel %vm234, %v218, %v233
        %236 = vst [vmem:[%s108] sm:$0xff] %v235
        %s237 = sand.u32 %s8, 1
        %s238 = sand.u32 %s8, 1
        %s239 = smul.addr %s238, 8
        %s240 = scalar_lea.vmem [#allocation1], %s239
        %s241 = sadd.s32 %s17, %s16
        %s242 = sadd.s32 %s241, %s15
        %s243 = sadd.s32 %s242, %s14
        %s244 = smul.addr %s243, 8
        %s245 = scalar_lea.vmem %s1, %s244
        // Predicated region
        $region55: #{custom-call.9} parent=53 // pred_check
          _
        $region56: #{custom-call.9} parent=53 // pred_check_branch
          %247 = sbr.rel (0) target = $region58
        $region57: #{custom-call.9} parent=53 // pred_region
          // Predicated region
          $region59: #{custom-call.9} parent=57 // pred_check
            _
          $region60: #{custom-call.9} parent=57 // pred_check_branch
            %249 = sbr.rel (0) target = $region62
          $region61: #{custom-call.9} parent=57 // pred_region
            // Predicated region
            $region74: #{custom-call.9} parent=61 // pred_check
              _
            $region75: #{custom-call.9} parent=61 // pred_check_branch
              %265 = sbr.rel (0) target = $region77
            $region76: #{custom-call.9} parent=61 // pred_region
              loop: start=0, step=1, limit=1
              $region78: #{custom-call.9} parent=76 // loop_pre_header
                _
              $region79: #{custom-call.9} parent=76 // loop_header
                %s267 = sphi 0, %s271
                %p268 = scmp.ge.s32.totalorder %s267, 1
                %s272 = sphi %s240, %s240
                %s273 = sphi %s245, %s245
              $region80: #{custom-call.9} parent=76 // loop_header_branch
                %270 = sbr.rel (%p268) target = $region84
              $region81: #{custom-call.9} parent=76 // loop_body
                %v274 = vld [vmem:[%s272] sm:$0xff]
                %275 = vst [vmem:[%s273] sm:$0xff] %v274
              $region82: #{custom-call.9} parent=76 // loop_footer
                %s271 = sadd.s32 1, %s267
              $region83: #{custom-call.9} parent=76 // loop_footer_branch
                %266 = sbr.rel target = $region79
              $region84: #{custom-call.9} parent=76 // loop_exit
                _
            $region77: #{custom-call.9} parent=61 // pred_fallthru
              _
            // Predicated region
            $region85: #{custom-call.9} parent=61 // pred_check
              _
            $region86: #{custom-call.9} parent=61 // pred_check_branch
              %277 = sbr.rel target = $region88
            $region87: #{custom-call.9} parent=61 // pred_region
              _
            $region88: #{custom-call.9} parent=61 // pred_fallthru
              _
          $region62: #{custom-call.9} parent=57 // pred_fallthru
            _
          // Predicated region
          $region63: #{custom-call.9} parent=57 // pred_check
            _
          $region64: #{custom-call.9} parent=57 // pred_check_branch
            %251 = sbr.rel target = $region66
          $region65: #{custom-call.9} parent=57 // pred_region
            %s253 = ssub.s32 256, 1
            loop: start=0, step=1, limit=1
            $region67: #{custom-call.9} parent=65 // loop_pre_header
              _
            $region68: #{custom-call.9} parent=65 // loop_header
              %s255 = sphi 0, %s259
              %p256 = scmp.ge.s32.totalorder %s255, 1
              %s260 = sphi %s240, %s240
              %s261 = sphi %s245, %s245
            $region69: #{custom-call.9} parent=65 // loop_header_branch
              %258 = sbr.rel (%p256) target = $region73
            $region70: #{custom-call.9} parent=65 // loop_body
              %v262 = vld [vmem:[%s260] sm:%s253]
              %263 = vst [vmem:[%s261] sm:%s253] %v262
            $region71: #{custom-call.9} parent=65 // loop_footer
              %s259 = sadd.s32 1, %s255
            $region72: #{custom-call.9} parent=65 // loop_footer_branch
              %254 = sbr.rel target = $region68
            $region73: #{custom-call.9} parent=65 // loop_exit
              _
          $region66: #{custom-call.9} parent=57 // pred_fallthru
            _
        $region58: #{custom-call.9} parent=53 // pred_fallthru
          _
        %278 = vnop
      $region54: #{custom-call.9} parent=5 // pred_fallthru
        _
      %p279 = scmp.le.s32.totalorder 2, %s3
      // Predicated region
      $region89: #{custom-call.9} parent=5 // pred_check
        %p280 = pneg %p279
      $region90: #{custom-call.9} parent=5 // pred_check_branch
        %282 = sbr.rel (%p280) target = $region92
      $region91: #{custom-call.9} parent=5 // pred_region
        %s283 = ssub.s32 %s3, 2
        %s284 = sand.u32 %s9, 1
        %s285 = sand.u32 %s9, 1
        %s286 = smul.addr %s285, 8
        %s287 = scalar_lea.vmem [#allocation1], %s286
      $region92: #{custom-call.9} parent=5 // pred_fallthru
        _
    $region6: #{custom-call.9} parent=1 // loop_footer
      %s7 = sadd.s32 1, %s3
    $region7: #{custom-call.9} parent=1 // loop_footer_branch
      %2 = sbr.rel target = $region3
    $region8: #{custom-call.9} parent=1 // loop_exit
      _

// kernel: _batched_fit.1
$region0: #{_batched_fit.1}
  #allocation0 [shape = 'u32[]', space=smem, size = 0x4, offset = 0x4, fixed_abs, tag = 'smem constant byte address 0x4 - core index']
  #allocation1 [shape = 'u32[72,128]{1,0:T(1,128)}', space=vmem, size = 0x9000, scoped, tag = 'internal scratch']
  %s0 = inlined_call_operand.vmem [shape: f32[2,256,8], index: 0, kind: input, shape index: {}]
  %s1 = inlined_call_operand.vmem [shape: f32[2,256,1], index: 1, kind: input, shape index: {}]
  %s2 = inlined_call_operand.vmem [shape: f32[2,8,8], index: 2, kind: output, shape index: {0}]
  %s3 = inlined_call_operand.vmem [shape: f32[2,8,1], index: 3, kind: output, shape index: {1}]
  %s4 = inlined_call_operand.vmem [shape: f32[2,1,1], index: 4, kind: output, shape index: {2}]
  %5 = xla_tuple %s2, %s3, %s4
  %s6 = sld [smem:[#allocation0]]
  $region65: #{_batched_fit.1} parent=0
    _
  %s8 = ssub.s32 1, %s6
  %s9 = scalar_select 0, %s8, %s6
  loop: start=0, step=1, limit=4
  $region2: #{_batched_fit.1} parent=0 // loop_pre_header
    _
  $region3: #{_batched_fit.1} parent=0 // loop_header
    %s11 = sphi 0, %s15
    %p12 = scmp.ge.s32.totalorder %s11, 4
    %s18 = sphi 0, %s30
    %s19 = sphi 0, %s26
    %s20 = sphi 0, %s18
    %s21 = sphi 0, %s19
    %s22 = sphi 0, %s20
    %s23 = sphi 0, %s21
    %s35 = sphi 0, %s37
    %s38 = sphi 0, %s35
    %s39 = sphi 0, %s38
    %s55 = sphi 0, %s39
    %s63 = sphi 0, %s65
    %s66 = sphi 0, %s63
    %s67 = sphi 0, %s66
    %s83 = sphi 0, %s67
    %s89 = sphi 0, %s91
    %s92 = sphi 0, %s89
    %s93 = sphi 0, %s92
    %s109 = sphi 0, %s93
    %s115 = sphi 0, %s117
    %s118 = sphi 0, %s115
    %s119 = sphi 0, %s118
    %s135 = sphi 0, %s119
    %s141 = sphi 0, %s143
    %s144 = sphi 0, %s141
    %s145 = sphi 0, %s144
    %s161 = sphi 0, %s145
  $region4: #{_batched_fit.1} parent=0 // loop_header_branch
    %14 = sbr.rel (%p12) target = $region8
  $region5: #{_batched_fit.1} parent=0 // loop_body
    %s16 = ssub.s32 %s11, 1
    %s17 = ssub.s32 %s11, 2
    %s24 = sadd.s32 1, %s19
    %p25 = scmp.ge.s32.totalorder %s24, 1
    %s26 = scalar_select %p25, 0, %s24
    %s27 = sadd.s32 1, %s18
    %s28 = scalar_select %p25, %s27, %s18
    %p29 = scmp.ge.s32.totalorder %s28, 2
    %s30 = scalar_select %p29, 0, %s28
    %s31 = ssub.s32 %s18, %s30
    %s32 = ssub.s32 %s19, %s26
    %s33 = sor.u32 %s31, %s32
    %p34 = scmp.eq.s32.totalorder %s33, 0
    %s36 = sadd.s32 %s35, 1
    %s37 = scalar_select %p34, %s35, %s36
    %p40 = pneg %p34
    %p41 = scmp.eq.s32.totalorder %s11, 1
    %p42 = por %p40, %p41
    %p43 = scmp.ne.s32.totalorder %s35, %s38
    %p44 = scmp.eq.s32.totalorder %s11, 0
    %p45 = por %p43, %p44
    %p46 = scmp.ne.s32.totalorder %s35, %s38
    %p47 = scmp.eq.s32.totalorder %s16, 1
    %p48 = por %p46, %p47
    %p49 = scmp.ne.s32.totalorder %s38, %s39
    %p50 = scmp.eq.s32.totalorder %s16, 0
    %p51 = por %p49, %p50
    %p52 = scmp.ne.s32.totalorder %s38, %s39
    %p53 = scmp.eq.s32.totalorder %s17, 1
    %p54 = por %p52, %p53
    %p56 = scmp.ne.s32.totalorder %s39, %s55
    %p57 = scmp.eq.s32.totalorder %s17, 0
    %p58 = por %p56, %p57
    %s59 = ssub.s32 %s18, %s30
    %s60 = ssub.s32 %s19, %s26
    %s61 = sor.u32 %s59, %s60
    %p62 = scmp.eq.s32.totalorder %s61, 0
    %s64 = sadd.s32 %s63, 1
    %s65 = scalar_select %p62, %s63, %s64
    %p68 = pneg %p62
    %p69 = scmp.eq.s32.totalorder %s11, 1
    %p70 = por %p68, %p69
    %p71 = scmp.ne.s32.totalorder %s63, %s66
    %p72 = scmp.eq.s32.totalorder %s11, 0
    %p73 = por %p71, %p72
    %p74 = scmp.ne.s32.totalorder %s63, %s66
    %p75 = scmp.eq.s32.totalorder %s16, 1
    %p76 = por %p74, %p75
    %p77 = scmp.ne.s32.totalorder %s66, %s67
    %p78 = scmp.eq.s32.totalorder %s16, 0
    %p79 = por %p77, %p78
    %p80 = scmp.ne.s32.totalorder %s66, %s67
    %p81 = scmp.eq.s32.totalorder %s17, 1
    %p82 = por %p80, %p81
    %p84 = scmp.ne.s32.totalorder %s67, %s83
    %p85 = scmp.eq.s32.totalorder %s17, 0
    %p86 = por %p84, %p85
    %s87 = ssub.s32 %s18, %s30
    %p88 = scmp.eq.s32.totalorder %s87, 0
    %s90 = sadd.s32 %s89, 1
    %s91 = scalar_select %p88, %s89, %s90
    %p94 = pneg %p88
    %p95 = scmp.eq.s32.totalorder %s11, 1
    %p96 = por %p94, %p95
    %p97 = scmp.ne.s32.totalorder %s89, %s92
    %p98 = scmp.eq.s32.totalorder %s11, 0
    %p99 = por %p97, %p98
    %p100 = scmp.ne.s32.totalorder %s89, %s92
    %p101 = scmp.eq.s32.totalorder %s16, 1
    %p102 = por %p100, %p101
    %p103 = scmp.ne.s32.totalorder %s92, %s93
    %p104 = scmp.eq.s32.totalorder %s16, 0
    %p105 = por %p103, %p104
    %p106 = scmp.ne.s32.totalorder %s92, %s93
    %p107 = scmp.eq.s32.totalorder %s17, 1
    %p108 = por %p106, %p107
    %p110 = scmp.ne.s32.totalorder %s93, %s109
    %p111 = scmp.eq.s32.totalorder %s17, 0
    %p112 = por %p110, %p111
    %s113 = ssub.s32 %s18, %s30
    %p114 = scmp.eq.s32.totalorder %s113, 0
    %s116 = sadd.s32 %s115, 1
    %s117 = scalar_select %p114, %s115, %s116
    %p120 = pneg %p114
    %p121 = scmp.eq.s32.totalorder %s11, 1
    %p122 = por %p120, %p121
    %p123 = scmp.ne.s32.totalorder %s115, %s118
    %p124 = scmp.eq.s32.totalorder %s11, 0
    %p125 = por %p123, %p124
    %p126 = scmp.ne.s32.totalorder %s115, %s118
    %p127 = scmp.eq.s32.totalorder %s16, 1
    %p128 = por %p126, %p127
    %p129 = scmp.ne.s32.totalorder %s118, %s119
    %p130 = scmp.eq.s32.totalorder %s16, 0
    %p131 = por %p129, %p130
    %p132 = scmp.ne.s32.totalorder %s118, %s119
    %p133 = scmp.eq.s32.totalorder %s17, 1
    %p134 = por %p132, %p133
    %p136 = scmp.ne.s32.totalorder %s119, %s135
    %p137 = scmp.eq.s32.totalorder %s17, 0
    %p138 = por %p136, %p137
    %s139 = ssub.s32 %s18, %s30
    %p140 = scmp.eq.s32.totalorder %s139, 0
    %s142 = sadd.s32 %s141, 1
    %s143 = scalar_select %p140, %s141, %s142
    %p146 = pneg %p140
    %p147 = scmp.eq.s32.totalorder %s11, 1
    %p148 = por %p146, %p147
    %p149 = scmp.ne.s32.totalorder %s141, %s144
    %p150 = scmp.eq.s32.totalorder %s11, 0
    %p151 = por %p149, %p150
    %p152 = scmp.ne.s32.totalorder %s141, %s144
    %p153 = scmp.eq.s32.totalorder %s16, 1
    %p154 = por %p152, %p153
    %p155 = scmp.ne.s32.totalorder %s144, %s145
    %p156 = scmp.eq.s32.totalorder %s16, 0
    %p157 = por %p155, %p156
    %p158 = scmp.ne.s32.totalorder %s144, %s145
    %p159 = scmp.eq.s32.totalorder %s17, 1
    %p160 = por %p158, %p159
    %p162 = scmp.ne.s32.totalorder %s145, %s161
    %p163 = scmp.eq.s32.totalorder %s17, 0
    %p164 = por %p162, %p163
    %p165 = scmp.le.s32.totalorder 1, %s11
    %p166 = scmp.lt.s32.totalorder %s11, 3
    %p167 = pnand %p165, %p166
    %p168 = pneg %p167
    // Predicated region
    $region9: #{_batched_fit.1} parent=5 // pred_check
      _
    $region10: #{_batched_fit.1} parent=5 // pred_check_branch
      %170 = sbr.rel (%p167) target = $region12
    $region11: #{_batched_fit.1} parent=5 // pred_region
      %s171 = ssub.s32 %s11, 1
    $region12: #{_batched_fit.1} parent=5 // pred_fallthru
      _
    %p172 = scmp.lt.s32.totalorder %s11, 2
    // Predicated region
    $region13: #{_batched_fit.1} parent=5 // pred_check
      %p173 = pneg %p172
    $region14: #{_batched_fit.1} parent=5 // pred_check_branch
      %175 = sbr.rel (%p173) target = $region16
    $region15: #{_batched_fit.1} parent=5 // pred_region
      // Predicated region
      $region17: #{_batched_fit.1} parent=15 // pred_check
        %p176 = pneg %p45
      $region18: #{_batched_fit.1} parent=15 // pred_check_branch
        %178 = sbr.rel (%p176) target = $region20
      $region19: #{_batched_fit.1} parent=15 // pred_region
        %s179 = smul.u32 32, %s19
        %p180 = scmp.lt.s32.totalorder %s18, 1
        %s181 = scalar_select %p180, %s18, 1
        %p182 = scmp.lt.s32.totalorder %s179, 31
        %s183 = scalar_select %p182, %s179, 31
        %s184 = smul.addr %s181, 32
        %s185 = sadd.s32 %s183, %s184
        %s186 = smul.addr %s185, 8
        %s187 = scalar_lea.vmem %s0, %s186
        %s188 = smul.u32 32, %s19
      $region20: #{_batched_fit.1} parent=15 // pred_fallthru
        _
      // Predicated region
      $region21: #{_batched_fit.1} parent=15 // pred_check
        %p189 = pneg %p73
      $region22: #{_batched_fit.1} parent=15 // pred_check_branch
        %191 = sbr.rel (%p189) target = $region24
      $region23: #{_batched_fit.1} parent=15 // pred_region
        %s192 = smul.u32 32, %s19
        %p193 = scmp.lt.s32.totalorder %s18, 1
        %s194 = scalar_select %p193, %s18, 1
        %p195 = scmp.lt.s32.totalorder %s192, 31
        %s196 = scalar_select %p195, %s192, 31
        %s197 = smul.addr %s194, 32
        %s198 = sadd.s32 %s196, %s197
        %s199 = smul.addr %s198, 8
        %s200 = scalar_lea.vmem %s1, %s199
        %s201 = smul.u32 32, %s19
      $region24: #{_batched_fit.1} parent=15 // pred_fallthru
        _
    $region16: #{_batched_fit.1} parent=5 // pred_fallthru
      _
    %p202 = scmp.le.s32.totalorder 1, %s11
    %p203 = scmp.lt.s32.totalorder %s11, 3
    %p204 = pnand %p202, %p203
    %p205 = pneg %p204
    // Predicated region
    $region25: #{_batched_fit.1} parent=5 // pred_check
      _
    $region26: #{_batched_fit.1} parent=5 // pred_check_branch
      %207 = sbr.rel (%p204) target = $region28
    $region27: #{_batched_fit.1} parent=5 // pred_region
      %s208 = ssub.s32 %s11, 1
      %s209 = smul.u32 32, %s21
      %p210 = scmp.lt.s32.totalorder %s20, 1
      %s211 = scalar_select %p210, %s20, 1
      %p212 = scmp.lt.s32.totalorder %s209, 31
      %s213 = scalar_select %p212, %s209, 31
      %s214 = smul.addr %s211, 32
      %s215 = sadd.s32 %s213, %s214
      %s216 = smul.addr %s215, 8
      %s217 = scalar_lea.vmem %s0, %s216
      %p218 = pneg %p51
      %p219 = pneg %p48
      %s220 = smul.u32 32, %s21
      %p221 = scmp.lt.s32.totalorder %s20, 1
      %s222 = scalar_select %p221, %s20, 1
      %p223 = scmp.lt.s32.totalorder %s220, 31
      %s224 = scalar_select %p223, %s220, 31
      %s225 = smul.addr %s222, 32
      %s226 = sadd.s32 %s224, %s225
      %s227 = smul.addr %s226, 8
      %s228 = scalar_lea.vmem %s1, %s227
      %p229 = pneg %p79
      %p230 = pneg %p76
      %p231 = pneg %p105
      %p232 = pneg %p102
      %p233 = scmp.lt.s32.totalorder %s20, 1
      %s234 = scalar_select %p233, %s20, 1
      %s235 = smul.addr %s234, 8
      %s236 = scalar_lea.vmem %s2, %s235
      %p237 = pneg %p131
      %p238 = pneg %p128
      %p239 = scmp.lt.s32.totalorder %s20, 1
      %s240 = scalar_select %p239, %s20, 1
      %s241 = smul.addr %s240, 8
      %s242 = scalar_lea.vmem %s3, %s241
      %p243 = pneg %p157
      %p244 = pneg %p154
      %p245 = scmp.lt.s32.totalorder %s20, 1
      %s246 = scalar_select %p245, %s20, 1
      %s247 = scalar_lea.vmem %s4, %s246
      %s248 = smul.u32 32, %s21
      %p249 = scmp.lt.s32.totalorder %s20, 1
      %s250 = scalar_select %p249, %s20, 1
      %p251 = scmp.lt.s32.totalorder %s248, 31
      %s252 = scalar_select %p251, %s248, 31
      %s253 = smul.addr %s250, 32
      %s254 = sadd.s32 %s252, %s253
      %s255 = smul.addr %s254, 8
      %s256 = scalar_lea.vmem %s0, %s255
      %s257 = smul.u32 32, %s21
      %s258 = smul.u32 32, %s21
      %p259 = scmp.lt.s32.totalorder %s20, 1
      %s260 = scalar_select %p259, %s20, 1
      %p261 = scmp.lt.s32.totalorder %s258, 31
      %s262 = scalar_select %p261, %s258, 31
      %s263 = smul.addr %s260, 32
      %s264 = sadd.s32 %s262, %s263
      %s265 = smul.addr %s264, 8
      %s266 = scalar_lea.vmem %s1, %s265
      %s267 = smul.u32 32, %s21
      %p268 = scmp.lt.s32.totalorder %s20, 1
      %s269 = scalar_select %p268, %s20, 1
      %s270 = smul.addr %s269, 8
      %s271 = scalar_lea.vmem %s2, %s270
      %p272 = scmp.lt.s32.totalorder %s20, 1
      %s273 = scalar_select %p272, %s20, 1
      %s274 = smul.addr %s273, 8
      %s275 = scalar_lea.vmem %s3, %s274
      %p276 = scmp.lt.s32.totalorder %s20, 1
      %s277 = scalar_select %p276, %s20, 1
      %s278 = scalar_lea.vmem %s4, %s277
      %v279 = vld [vmem:[%s256] sm:$0xff]
      %v280 = vld [vmem:[%s256 + $0x8] sm:$0xff]
      %v281 = vld [vmem:[%s256 + $0x10] sm:$0xff]
      %v282 = vld [vmem:[%s256 + $0x18] sm:$0xff]
      %v283 = vld [vmem:[%s256 + $0x20] sm:$0xff]
      %v284 = vld [vmem:[%s256 + $0x28] sm:$0xff]
      %v285 = vld [vmem:[%s256 + $0x30] sm:$0xff]
      %v286 = vld [vmem:[%s256 + $0x38] sm:$0xff]
      %v287 = vld [vmem:[%s256 + $0x40] sm:$0xff]
      %v288 = vld [vmem:[%s256 + $0x48] sm:$0xff]
      %v289 = vld [vmem:[%s256 + $0x50] sm:$0xff]
      %v290 = vld [vmem:[%s256 + $0x58] sm:$0xff]
      %v291 = vld [vmem:[%s256 + $0x60] sm:$0xff]
      %v292 = vld [vmem:[%s256 + $0x68] sm:$0xff]
      %v293 = vld [vmem:[%s256 + $0x70] sm:$0xff]
      %v294 = vld [vmem:[%s256 + $0x78] sm:$0xff]
      %v295 = vld [vmem:[%s256 + $0x80] sm:$0xff]
      %v296 = vld [vmem:[%s256 + $0x88] sm:$0xff]
      %v297 = vld [vmem:[%s256 + $0x90] sm:$0xff]
      %v298 = vld [vmem:[%s256 + $0x98] sm:$0xff]
      %v299 = vld [vmem:[%s256 + $0xa0] sm:$0xff]
      %v300 = vld [vmem:[%s256 + $0xa8] sm:$0xff]
      %v301 = vld [vmem:[%s256 + $0xb0] sm:$0xff]
      %v302 = vld [vmem:[%s256 + $0xb8] sm:$0xff]
      %v303 = vld [vmem:[%s256 + $0xc0] sm:$0xff]
      %v304 = vld [vmem:[%s256 + $0xc8] sm:$0xff]
      %v305 = vld [vmem:[%s256 + $0xd0] sm:$0xff]
      %v306 = vld [vmem:[%s256 + $0xd8] sm:$0xff]
      %v307 = vld [vmem:[%s256 + $0xe0] sm:$0xff]
      %v308 = vld [vmem:[%s256 + $0xe8] sm:$0xff]
      %v309 = vld [vmem:[%s256 + $0xf0] sm:$0xff]
      %v310 = vld [vmem:[%s256 + $0xf8] sm:$0xff]
      %v311 = vld [vmem:[%s266] sm:$0xff]
      %v312 = vld [vmem:[%s266 + $0x8] sm:$0xff]
      %v313 = vld [vmem:[%s266 + $0x10] sm:$0xff]
      %v314 = vld [vmem:[%s266 + $0x18] sm:$0xff]
      %v315 = vld [vmem:[%s266 + $0x20] sm:$0xff]
      %v316 = vld [vmem:[%s266 + $0x28] sm:$0xff]
      %v317 = vld [vmem:[%s266 + $0x30] sm:$0xff]
      %v318 = vld [vmem:[%s266 + $0x38] sm:$0xff]
      %v319 = vld [vmem:[%s266 + $0x40] sm:$0xff]
      %v320 = vld [vmem:[%s266 + $0x48] sm:$0xff]
      %v321 = vld [vmem:[%s266 + $0x50] sm:$0xff]
      %v322 = vld [vmem:[%s266 + $0x58] sm:$0xff]
      %v323 = vld [vmem:[%s266 + $0x60] sm:$0xff]
      %v324 = vld [vmem:[%s266 + $0x68] sm:$0xff]
      %v325 = vld [vmem:[%s266 + $0x70] sm:$0xff]
      %v326 = vld [vmem:[%s266 + $0x78] sm:$0xff]
      %v327 = vld [vmem:[%s266 + $0x80] sm:$0xff]
      %v328 = vld [vmem:[%s266 + $0x88] sm:$0xff]
      %v329 = vld [vmem:[%s266 + $0x90] sm:$0xff]
      %v330 = vld [vmem:[%s266 + $0x98] sm:$0xff]
      %v331 = vld [vmem:[%s266 + $0xa0] sm:$0xff]
      %v332 = vld [vmem:[%s266 + $0xa8] sm:$0xff]
      %v333 = vld [vmem:[%s266 + $0xb0] sm:$0xff]
      %v334 = vld [vmem:[%s266 + $0xb8] sm:$0xff]
      %v335 = vld [vmem:[%s266 + $0xc0] sm:$0xff]
      %v336 = vld [vmem:[%s266 + $0xc8] sm:$0xff]
      %v337 = vld [vmem:[%s266 + $0xd0] sm:$0xff]
      %v338 = vld [vmem:[%s266 + $0xd8] sm:$0xff]
      %v339 = vld [vmem:[%s266 + $0xe0] sm:$0xff]
      %v340 = vld [vmem:[%s266 + $0xe8] sm:$0xff]
      %v341 = vld [vmem:[%s266 + $0xf0] sm:$0xff]
      %v342 = vld [vmem:[%s266 + $0xf8] sm:$0xff]
      %343 = vxpose.xlu0.b32.start [1/16] %v279, 128
      %344 = vxpose.xlu0.b32.cont [2/16] %v280, 128
      %345 = vxpose.xlu0.b32.cont [3/16] %v281, 128
      %346 = vxpose.xlu0.b32.cont [4/16] %v282, 128
      %347 = vxpose.xlu0.b32.cont [5/16] %v283, 128
      %348 = vxpose.xlu0.b32.cont [6/16] %v284, 128
      %349 = vxpose.xlu0.b32.cont [7/16] %v285, 128
      %350 = vxpose.xlu0.b32.cont [8/16] %v286, 128
      %351 = vxpose.xlu0.b32.cont [9/16] %v287, 128
      %352 = vxpose.xlu0.b32.cont [10/16] %v288, 128
      %353 = vxpose.xlu0.b32.cont [11/16] %v289, 128
      %354 = vxpose.xlu0.b32.cont [12/16] %v290, 128
      %355 = vxpose.xlu0.b32.cont [13/16] %v291, 128
      %356 = vxpose.xlu0.b32.cont [14/16] %v292, 128
      %357 = vxpose.xlu0.b32.cont [15/16] %v293, 128
      %358 = vxpose.xlu0.b32.end [16/16] %v294, 128
      %v359 = vpop.trf.xlu0
      %v360 = vpop.trf.xlu0
      %v361 = vpop.trf.xlu0
      %v362 = vpop.trf.xlu0
      %v363 = vpop.trf.xlu0
      %v364 = vpop.trf.xlu0
      %v365 = vpop.trf.xlu0
      %v366 = vpop.trf.xlu0
      %v367 = vpop.trf.xlu0
      %v368 = vpop.trf.xlu0
      %v369 = vpop.trf.xlu0
      %v370 = vpop.trf.xlu0
      %v371 = vpop.trf.xlu0
      %v372 = vpop.trf.xlu0
      %v373 = vpop.trf.xlu0
      %v374 = vpop.trf.xlu0
      %375 = vxpose.xlu0.b32.start [1/16] %v295, 128
      %376 = vxpose.xlu0.b32.cont [2/16] %v296, 128
      %377 = vxpose.xlu0.b32.cont [3/16] %v297, 128
      %378 = vxpose.xlu0.b32.cont [4/16] %v298, 128
      %379 = vxpose.xlu0.b32.cont [5/16] %v299, 128
      %380 = vxpose.xlu0.b32.cont [6/16] %v300, 128
      %381 = vxpose.xlu0.b32.cont [7/16] %v301, 128
      %382 = vxpose.xlu0.b32.cont [8/16] %v302, 128
      %383 = vxpose.xlu0.b32.cont [9/16] %v303, 128
      %384 = vxpose.xlu0.b32.cont [10/16] %v304, 128
      %385 = vxpose.xlu0.b32.cont [11/16] %v305, 128
      %386 = vxpose.xlu0.b32.cont [12/16] %v306, 128
      %387 = vxpose.xlu0.b32.cont [13/16] %v307, 128
      %388 = vxpose.xlu0.b32.cont [14/16] %v308, 128
      %389 = vxpose.xlu0.b32.cont [15/16] %v309, 128
      %390 = vxpose.xlu0.b32.end [16/16] %v310, 128
      %v391 = vpop.trf.xlu0
      %v392 = vpop.trf.xlu0
      %v393 = vpop.trf.xlu0
      %v394 = vpop.trf.xlu0
      %v395 = vpop.trf.xlu0
      %v396 = vpop.trf.xlu0
      %v397 = vpop.trf.xlu0
      %v398 = vpop.trf.xlu0
      %v399 = vpop.trf.xlu0
      %v400 = vpop.trf.xlu0
      %v401 = vpop.trf.xlu0
      %v402 = vpop.trf.xlu0
      %v403 = vpop.trf.xlu0
      %v404 = vpop.trf.xlu0
      %v405 = vpop.trf.xlu0
      %v406 = vpop.trf.xlu0
      %407 = vmatpush.msra.mxu0 %v294
      %408 = vmatpush.msra.mxu0 %v293
      %409 = vmatpush.msra.mxu0 %v292
      %410 = vmatpush.msra.mxu0 %v291
      %411 = vmatpush.msra.mxu0 %v290
      %412 = vmatpush.msra.mxu0 %v289
      %413 = vmatpush.msra.mxu0 %v288
      %414 = vmatpush.msra.mxu0 %v287
      %415 = vmatpush.msra.mxu0 %v286
      %416 = vmatpush.msra.mxu0 %v285
      %417 = vmatpush.msra.mxu0 %v284
      %418 = vmatpush.msra.mxu0 %v283
      %419 = vmatpush.msra.mxu0 %v282
      %420 = vmatpush.msra.mxu0 %v281
      %421 = vmatpush.msra.mxu0 %v280
      %422 = vmatpush.msra.mxu0 %v279
      %423 = vmatmul.f32.gmra.mxu0 %v359
      %v424 = vpop.f32.mrf.mxu0
      %v425 = vadd.f32 0.0, %v424
      %426 = vdwg.mxu0
      %427 = vmatpush.msra.mxu0 %v310
      %428 = vmatpush.msra.mxu0 %v309
      %429 = vmatpush.msra.mxu0 %v308
      %430 = vmatpush.msra.mxu0 %v307
      %431 = vmatpush.msra.mxu0 %v306
      %432 = vmatpush.msra.mxu0 %v305
      %433 = vmatpush.msra.mxu0 %v304
      %434 = vmatpush.msra.mxu0 %v303
      %435 = vmatpush.msra.mxu0 %v302
      %436 = vmatpush.msra.mxu0 %v301
      %437 = vmatpush.msra.mxu0 %v300
      %438 = vmatpush.msra.mxu0 %v299
      %439 = vmatpush.msra.mxu0 %v298
      %440 = vmatpush.msra.mxu0 %v297
      %441 = vmatpush.msra.mxu0 %v296
      %442 = vmatpush.msra.mxu0 %v295
      %443 = vmatmul.f32.gmra.mxu0 %v391
      %v444 = vpop.f32.mrf.mxu0
      %v445 = vadd.f32 %v425, %v444
      %446 = vdwg.mxu0
      %447 = vmatpush.msra.mxu0 %v326
      %448 = vmatpush.msra.mxu0 %v325
      %449 = vmatpush.msra.mxu0 %v324
      %450 = vmatpush.msra.mxu0 %v323
      %451 = vmatpush.msra.mxu0 %v322
      %452 = vmatpush.msra.mxu0 %v321
      %453 = vmatpush.msra.mxu0 %v320
      %454 = vmatpush.msra.mxu0 %v319
      %455 = vmatpush.msra.mxu0 %v318
      %456 = vmatpush.msra.mxu0 %v317
      %457 = vmatpush.msra.mxu0 %v316
      %458 = vmatpush.msra.mxu0 %v315
      %459 = vmatpush.msra.mxu0 %v314
      %460 = vmatpush.msra.mxu0 %v313
      %461 = vmatpush.msra.mxu0 %v312
      %462 = vmatpush.msra.mxu0 %v311
      %463 = vmatmul.f32.gmra.mxu0 %v359
      %v464 = vpop.f32.mrf.mxu0
      %v465 = vadd.f32 0.0, %v464
      %466 = vdwg.mxu0
      %467 = vmatpush.msra.mxu0 %v342
      %468 = vmatpush.msra.mxu0 %v341
      %469 = vmatpush.msra.mxu0 %v340
      %470 = vmatpush.msra.mxu0 %v339
      %471 = vmatpush.msra.mxu0 %v338
      %472 = vmatpush.msra.mxu0 %v337
      %473 = vmatpush.msra.mxu0 %v336
      %474 = vmatpush.msra.mxu0 %v335
      %475 = vmatpush.msra.mxu0 %v334
      %476 = vmatpush.msra.mxu0 %v333
      %477 = vmatpush.msra.mxu0 %v332
      %478 = vmatpush.msra.mxu0 %v331
      %479 = vmatpush.msra.mxu0 %v330
      %480 = vmatpush.msra.mxu0 %v329
      %481 = vmatpush.msra.mxu0 %v328
      %482 = vmatpush.msra.mxu0 %v327
      %483 = vmatmul.f32.gmra.mxu0 %v391
      %v484 = vpop.f32.mrf.mxu0
      %v485 = vadd.f32 %v465, %v484
      %486 = vdwg.mxu0
      %v487 = vmul.f32 %v311, %v311
      %v488 = vmul.f32 %v312, %v312
      %v489 = vmul.f32 %v313, %v313
      %v490 = vmul.f32 %v314, %v314
      %v491 = vmul.f32 %v315, %v315
      %v492 = vmul.f32 %v316, %v316
      %v493 = vmul.f32 %v317, %v317
      %v494 = vmul.f32 %v318, %v318
      %v495 = vmul.f32 %v319, %v319
      %v496 = vmul.f32 %v320, %v320
      %v497 = vmul.f32 %v321, %v321
      %v498 = vmul.f32 %v322, %v322
      %v499 = vmul.f32 %v323, %v323
      %v500 = vmul.f32 %v324, %v324
      %v501 = vmul.f32 %v325, %v325
      %v502 = vmul.f32 %v326, %v326
      %v503 = vmul.f32 %v327, %v327
      %v504 = vmul.f32 %v328, %v328
      %v505 = vmul.f32 %v329, %v329
      %v506 = vmul.f32 %v330, %v330
      %v507 = vmul.f32 %v331, %v331
      %v508 = vmul.f32 %v332, %v332
      %v509 = vmul.f32 %v333, %v333
      %v510 = vmul.f32 %v334, %v334
      %v511 = vmul.f32 %v335, %v335
      %v512 = vmul.f32 %v336, %v336
      %v513 = vmul.f32 %v337, %v337
      %v514 = vmul.f32 %v338, %v338
      %v515 = vmul.f32 %v339, %v339
      %v516 = vmul.f32 %v340, %v340
      %v517 = vmul.f32 %v341, %v341
      %v518 = vmul.f32 %v342, %v342
      %vm519 = vcmask 7168
      %v520 = vsel %vm519, %v487, 0.0
      %v521 = vsel %vm519, %v488, 0.0
      %v522 = vadd.f32 %v520, %v521
      %v523 = vsel %vm519, %v489, 0.0
      %v524 = vadd.f32 %v522, %v523
      %v525 = vsel %vm519, %v490, 0.0
      %v526 = vadd.f32 %v524, %v525
      %v527 = vsel %vm519, %v491, 0.0
      %v528 = vadd.f32 %v526, %v527
      %v529 = vsel %vm519, %v492, 0.0
      %v530 = vadd.f32 %v528, %v529
      %v531 = vsel %vm519, %v493, 0.0
      %v532 = vadd.f32 %v530, %v531
      %v533 = vsel %vm519, %v494, 0.0
      %v534 = vadd.f32 %v532, %v533
      %v535 = vsel %vm519, %v495, 0.0
      %v536 = vadd.f32 %v534, %v535
      %v537 = vsel %vm519, %v496, 0.0
      %v538 = vadd.f32 %v536, %v537
      %v539 = vsel %vm519, %v497, 0.0
      %v540 = vadd.f32 %v538, %v539
      %v541 = vsel %vm519, %v498, 0.0
      %v542 = vadd.f32 %v540, %v541
      %v543 = vsel %vm519, %v499, 0.0
      %v544 = vadd.f32 %v542, %v543
      %v545 = vsel %vm519, %v500, 0.0
      %v546 = vadd.f32 %v544, %v545
      %v547 = vsel %vm519, %v501, 0.0
      %v548 = vadd.f32 %v546, %v547
      %v549 = vsel %vm519, %v502, 0.0
      %v550 = vadd.f32 %v548, %v549
      %v551 = vsel %vm519, %v503, 0.0
      %v552 = vadd.f32 %v550, %v551
      %v553 = vsel %vm519, %v504, 0.0
      %v554 = vadd.f32 %v552, %v553
      %v555 = vsel %vm519, %v505, 0.0
      %v556 = vadd.f32 %v554, %v555
      %v557 = vsel %vm519, %v506, 0.0
      %v558 = vadd.f32 %v556, %v557
      %v559 = vsel %vm519, %v507, 0.0
      %v560 = vadd.f32 %v558, %v559
      %v561 = vsel %vm519, %v508, 0.0
      %v562 = vadd.f32 %v560, %v561
      %v563 = vsel %vm519, %v509, 0.0
      %v564 = vadd.f32 %v562, %v563
      %v565 = vsel %vm519, %v510, 0.0
      %v566 = vadd.f32 %v564, %v565
      %v567 = vsel %vm519, %v511, 0.0
      %v568 = vadd.f32 %v566, %v567
      %v569 = vsel %vm519, %v512, 0.0
      %v570 = vadd.f32 %v568, %v569
      %v571 = vsel %vm519, %v513, 0.0
      %v572 = vadd.f32 %v570, %v571
      %v573 = vsel %vm519, %v514, 0.0
      %v574 = vadd.f32 %v572, %v573
      %v575 = vsel %vm519, %v515, 0.0
      %v576 = vadd.f32 %v574, %v575
      %v577 = vsel %vm519, %v516, 0.0
      %v578 = vadd.f32 %v576, %v577
      %v579 = vsel %vm519, %v517, 0.0
      %v580 = vadd.f32 %v578, %v579
      %v581 = vsel %vm519, %v518, 0.0
      %v582 = vadd.f32 %v580, %v581
      %v583 = vrot.slane %v582, 4
      %v584 = vadd.f32 %v582, %v583
      %v585 = vrot.slane %v584, 2
      %v586 = vadd.f32 %v584, %v585
      %v587 = vrot.slane %v586, 1
      %v588 = vadd.f32 %v586, %v587
      %p589 = scmp.eq.s32.totalorder %s21, 0
      // Predicated region
      $region29: #{_batched_fit.1} parent=27 // pred_check
        %p590 = pneg %p589
      $region30: #{_batched_fit.1} parent=27 // pred_check_branch
        %592 = sbr.rel (%p590) target = $region32
      $region31: #{_batched_fit.1} parent=27 // pred_region
        %vm593 = vcmask 64512
        %594 = vst.msk [vmem:[%s271] sm:$0xff] %vm593, %v445
        %595 = vst.msk [vmem:[%s275] sm:$0xff] %vm519, %v485
        %vm596 = vcmask 0
        %597 = vst.msk [vmem:[%s278] sm:$0x1] %vm596, %v588
      $region32: #{_batched_fit.1} parent=27 // pred_fallthru
        _
      %p598 = scmp.gt.s32.totalorder %s21, 0
      // Predicated region
      $region33: #{_batched_fit.1} parent=27 // pred_check
        %p599 = pneg %p598
      $region34: #{_batched_fit.1} parent=27 // pred_check_branch
        %601 = sbr.rel (%p599) target = $region36
      $region35: #{_batched_fit.1} parent=27 // pred_region
        %v602 = vld [vmem:[%s271] sm:$0xff]
        %v603 = vadd.f32 %v602, %v445
        %vm604 = vcmask 64512
        %605 = vst.msk [vmem:[%s271] sm:$0xff] %vm604, %v603
        %v606 = vld [vmem:[%s275] sm:$0xff]
        %v607 = vadd.f32 %v606, %v485
        %608 = vst.msk [vmem:[%s275] sm:$0xff] %vm519, %v607
        %v609 = vld [vmem:[%s278] sm:$0x1]
        %v610 = vadd.f32 %v609, %v588
        %vm611 = vcmask 0
        %612 = vst.msk [vmem:[%s278] sm:$0x1] %vm611, %v610
      $region36: #{_batched_fit.1} parent=27 // pred_fallthru
        _
      %p613 = scmp.lt.s32.totalorder %s20, 1
      %s614 = scalar_select %p613, %s20, 1
      %s615 = smul.addr %s614, 8
      %s616 = scalar_lea.vmem %s2, %s615
      %p617 = scmp.lt.s32.totalorder %s20, 1
      %s618 = scalar_select %p617, %s20, 1
      %s619 = smul.addr %s618, 8
      %s620 = scalar_lea.vmem %s3, %s619
      %p621 = scmp.lt.s32.totalorder %s20, 1
      %s622 = scalar_select %p621, %s20, 1
      %s623 = scalar_lea.vmem %s4, %s622
      // Predicated region
      $region37: #{_batched_fit.1} parent=27 // pred_check
        %p624 = pneg %p102
      $region38: #{_batched_fit.1} parent=27 // pred_check_branch
        %626 = sbr.rel (%p624) target = $region40
      $region39: #{_batched_fit.1} parent=27 // pred_region
        _
      $region40: #{_batched_fit.1} parent=27 // pred_fallthru
        _
      // Predicated region
      $region41: #{_batched_fit.1} parent=27 // pred_check
        %p627 = pneg %p128
      $region42: #{_batched_fit.1} parent=27 // pred_check_branch
        %629 = sbr.rel (%p627) target = $region44
      $region43: #{_batched_fit.1} parent=27 // pred_region
        _
      $region44: #{_batched_fit.1} parent=27 // pred_fallthru
        _
      // Predicated region
      $region45: #{_batched_fit.1} parent=27 // pred_check
        %p630 = pneg %p154
      $region46: #{_batched_fit.1} parent=27 // pred_check_branch
        %632 = sbr.rel (%p630) target = $region48
      $region47: #{_batched_fit.1} parent=27 // pred_region
        _
      $region48: #{_batched_fit.1} parent=27 // pred_fallthru
        _
    $region28: #{_batched_fit.1} parent=5 // pred_fallthru
      _
    %p633 = scmp.le.s32.totalorder 2, %s11
    // Predicated region
    $region49: #{_batched_fit.1} parent=5 // pred_check
      %p634 = pneg %p633
    $region50: #{_batched_fit.1} parent=5 // pred_check_branch
      %636 = sbr.rel (%p634) target = $region52
    $region51: #{_batched_fit.1} parent=5 // pred_region
      %s637 = ssub.s32 %s11, 2
      // Predicated region
      $region53: #{_batched_fit.1} parent=51 // pred_check
        %p638 = pneg %p108
      $region54: #{_batched_fit.1} parent=51 // pred_check_branch
        %640 = sbr.rel (%p638) target = $region56
      $region55: #{_batched_fit.1} parent=51 // pred_region
        %p641 = scmp.lt.s32.totalorder %s22, 1
        %s642 = scalar_select %p641, %s22, 1
        %s643 = smul.addr %s642, 8
        %s644 = scalar_lea.vmem %s2, %s643
      $region56: #{_batched_fit.1} parent=51 // pred_fallthru
        _
      // Predicated region
      $region57: #{_batched_fit.1} parent=51 // pred_check
        %p645 = pneg %p134
      $region58: #{_batched_fit.1} parent=51 // pred_check_branch
        %647 = sbr.rel (%p645) target = $region60
      $region59: #{_batched_fit.1} parent=51 // pred_region
        %p648 = scmp.lt.s32.totalorder %s22, 1
        %s649 = scalar_select %p648, %s22, 1
        %s650 = smul.addr %s649, 8
        %s651 = scalar_lea.vmem %s3, %s650
      $region60: #{_batched_fit.1} parent=51 // pred_fallthru
        _
      // Predicated region
      $region61: #{_batched_fit.1} parent=51 // pred_check
        %p652 = pneg %p160
      $region62: #{_batched_fit.1} parent=51 // pred_check_branch
        %654 = sbr.rel (%p652) target = $region64
      $region63: #{_batched_fit.1} parent=51 // pred_region
        %p655 = scmp.lt.s32.totalorder %s22, 1
        %s656 = scalar_select %p655, %s22, 1
        %s657 = scalar_lea.vmem %s4, %s656
      $region64: #{_batched_fit.1} parent=51 // pred_fallthru
        _
    $region52: #{_batched_fit.1} parent=5 // pred_fallthru
      _
  $region6: #{_batched_fit.1} parent=0 // loop_footer
    %s15 = sadd.s32 1, %s11
  $region7: #{_batched_fit.1} parent=0 // loop_footer_branch
    %10 = sbr.rel target = $region3
  $region8: #{_batched_fit.1} parent=0 // loop_exit
    _

</llo_original>
